<compile_context>
chip_gen: v5e
topology: v5e:2x2
jax: 0.10.0
libtpu: 0.0.40
codegen_flags: <defaults>
</compile_context>

<pallas_src>
import jax
import jax.numpy as jnp
from jax.experimental import pallas as pl
from jax.experimental.pallas import tpu as pltpu


def _lstm3_kernel(x_ref, wih_ref, whh_ref, b_ref, bases_ref, out_ref):
    """Full LSTM recurrence + bases projection for one batch block.

    x_ref:     (Bb, T, D)   inputs for this batch block (MXU dtype)
    wih_ref:   (D, 4H)      W_ih^T (MXU dtype)
    whh_ref:   (H, 4H)      W_hh^T (MXU dtype)
    b_ref:     (1, 4H)      b_ih + b_hh (f32)
    bases_ref: (H, Pp)      bases, lane-padded to a multiple of 128 (MXU dtype)
    out_ref:   (Bb, Pp)     f32 output block
    """
    bb, t_len, d_in = x_ref.shape
    hidden = whh_ref.shape[0]
    four_h = whh_ref.shape[1]
    mxu_dt = whh_ref.dtype

    # ---- Hoisted input projection: one MXU matmul with M = Bb*T rows --------
    x_all = x_ref[...].reshape(bb * t_len, d_in)
    gx = (jnp.dot(x_all, wih_ref[...], preferred_element_type=jnp.float32)
          + b_ref[...]).reshape(bb, t_len, four_h)            # (Bb, T, 4H) f32

    whh = whh_ref[...]

    # Lane mask selecting the "g" gate (tanh) lanes; hoisted out of the loop.
    lane = jax.lax.broadcasted_iota(jnp.int32, (bb, four_h), 1)
    g_lanes = (lane >= 2 * hidden) & (lane < 3 * hidden)

    h = jnp.zeros((bb, hidden), jnp.float32)
    c = jnp.zeros((bb, hidden), jnp.float32)

    # Fully unrolled recurrence (T is a small static trace-time constant).
    # Only h @ W_hh^T + precomputed gx[:, t] remains in the serial chain.
    for t in range(t_len):
        gates = gx[:, t, :] + jnp.dot(h.astype(mxu_dt), whh,
                                      preferred_element_type=jnp.float32)
        # Whole-vreg activations + lane-mask select, then slice each gate once.
        act = jnp.where(g_lanes, jnp.tanh(gates), jax.nn.sigmoid(gates))
        i_g = act[:, 0 * hidden:1 * hidden]
        f_g = act[:, 1 * hidden:2 * hidden]
        g_g = act[:, 2 * hidden:3 * hidden]
        o_g = act[:, 3 * hidden:4 * hidden]
        c = f_g * c + i_g * g_g
        h = o_g * jnp.tanh(c)

    # out = h_n[-1] @ bases   (lane-dense padded-P slab)
    out_ref[...] = jnp.dot(h.astype(mxu_dt), bases_ref[...],
                           preferred_element_type=jnp.float32
                           ).astype(out_ref.dtype)


def lstm3_forward(x, w_ih, w_hh, b_ih, b_hh, bases, *,
                  mxu_dtype=jnp.bfloat16, batch_block=None):
    """x: (B, T, D) batch_first. w_ih: (4H, D), w_hh: (4H, H), biases: (4H,),
    bases: (H, P). Returns (B, P) float32.

    mxu_dtype: dtype fed to the MXU operands (bf16 recommended on v6e/v7x,
               f32 for exact matching); all element-wise math stays f32.
    batch_block: optional batch tile; batch blocks are independent and the
               grid axis is "parallel" (usable to split across v7x TCs)."""
    B, T, D = x.shape
    four_h, H = w_hh.shape
    P = bases.shape[1]
    p_pad = ((P + 127) // 128) * 128          # lane-dense output slab
    mxu_dtype = jnp.dtype(mxu_dtype)

    bb = B if batch_block is None else batch_block
    assert B % bb == 0, "batch_block must divide batch"
    n_b = B // bb

    x_in = x.astype(mxu_dtype)                                  # (B, T, D)
    wih_t = jnp.transpose(w_ih).astype(mxu_dtype)               # (D, 4H)
    whh_t = jnp.transpose(w_hh).astype(mxu_dtype)               # (H, 4H)
    bias = (b_ih + b_hh).reshape(1, four_h).astype(jnp.float32)  # (1, 4H)
    bases_p = bases.astype(mxu_dtype)                            # (H, P)
    if p_pad != P:
        bases_p = jnp.pad(bases_p, ((0, 0), (0, p_pad - P)))     # (H, Pp)

    grid_spec = pltpu.PrefetchScalarGridSpec(
        num_scalar_prefetch=0,
        grid=(n_b,),                              # time loop is inside the kernel
        in_specs=[
            pl.BlockSpec((bb, T, D), lambda b: (b, 0, 0)),       # x batch block
            pl.BlockSpec((D, four_h), lambda b: (0, 0)),         # W_ih^T (invariant)
            pl.BlockSpec((H, four_h), lambda b: (0, 0)),         # W_hh^T (invariant)
            pl.BlockSpec((1, four_h), lambda b: (0, 0)),         # bias   (invariant)
            pl.BlockSpec((H, p_pad), lambda b: (0, 0)),          # bases  (invariant)
        ],
        out_specs=pl.BlockSpec((bb, p_pad), lambda b: (b, 0)),
    )

    out = pl.pallas_call(
        _lstm3_kernel,
        out_shape=jax.ShapeDtypeStruct((B, p_pad), jnp.float32),
        grid_spec=grid_spec,
        compiler_params=pltpu.CompilerParams(
            dimension_semantics=("parallel",),    # batch blocks are independent
        ),
    )(x_in, wih_t, whh_t, bias, bases_p)

    return out[:, :P] if p_pad != P else out


def _reference_forward(x, w_ih, w_hh, b_ih, b_hh, bases):
    """Pure-JAX reference matching torch.nn.LSTM semantics (gate order i,f,g,o)."""
    B, T, D = x.shape
    H = w_hh.shape[1]
    h = jnp.zeros((B, H), jnp.float32)
    c = jnp.zeros((B, H), jnp.float32)
    wih_t = w_ih.T
    whh_t = w_hh.T
    bias = b_ih + b_hh

    def step(carry, x_t):
        h, c = carry
        g = x_t @ wih_t + h @ whh_t + bias
        i = jax.nn.sigmoid(g[:, 0 * H:1 * H])
        f = jax.nn.sigmoid(g[:, 1 * H:2 * H])
        gg = jnp.tanh(g[:, 2 * H:3 * H])
        o = jax.nn.sigmoid(g[:, 3 * H:4 * H])
        c = f * c + i * gg
        h = o * jnp.tanh(c)
        return (h, c), None

    (h, c), _ = jax.lax.scan(step, (h, c), jnp.transpose(x, (1, 0, 2)))
    return h @ bases


if __name__ == "__main__":
    # Small shapes consistent with the module's forward:
    B, T, D, H = 8, 8, 16, 32          # batch, seq, input_size, hidden(=output_size)
    height, width = 8, 8               # bases projects hidden -> height*width
    P = height * width

    key = jax.random.PRNGKey(0)
    ks = jax.random.split(key, 6)
    bound = 1.0 / jnp.sqrt(H)          # PyTorch LSTM default init scale
    x = jax.random.normal(ks[0], (B, T, D), jnp.float32)
    w_ih = jax.random.uniform(ks[1], (4 * H, D), jnp.float32, -bound, bound)
    w_hh = jax.random.uniform(ks[2], (4 * H, H), jnp.float32, -bound, bound)
    b_ih = jax.random.uniform(ks[3], (4 * H,), jnp.float32, -bound, bound)
    b_hh = jax.random.uniform(ks[4], (4 * H,), jnp.float32, -bound, bound)
    bases = jax.random.normal(ks[5], (H, P), jnp.float32)

    ref = _reference_forward(x, w_ih, w_hh, b_ih, b_hh, bases)

    # Full-precision path: strict correctness check vs pure-JAX reference.
    out_f32 = jax.block_until_ready(
        lstm3_forward(x, w_ih, w_hh, b_ih, b_hh, bases, mxu_dtype=jnp.float32))
    assert out_f32.shape == (B, P)
    assert jnp.allclose(out_f32, ref, atol=1e-4, rtol=1e-4), "f32 mismatch vs reference"

    # bf16-MXU path (perf configuration for v6e/v7x); element-wise math stays f32.
    out_bf16 = jax.block_until_ready(
        lstm3_forward(x, w_ih, w_hh, b_ih, b_hh, bases, mxu_dtype=jnp.bfloat16))
    assert out_bf16.shape == (B, P)
    assert jnp.allclose(out_bf16, ref, atol=2e-1, rtol=2e-1), "bf16 mismatch vs reference"

    print("KERNEL_OK")
</pallas_src>

<mosaic_0001>
module attributes {stable_mosaic.version = 11 : i64} {
  func.func @_lstm3_kernel(%arg0: i32, %arg1: memref<8x8x16xf32, #tpu.memory_space<vmem>>, %arg2: memref<16x128xf32, #tpu.memory_space<vmem>>, %arg3: memref<32x128xf32, #tpu.memory_space<vmem>>, %arg4: memref<1x128xf32, #tpu.memory_space<vmem>>, %arg5: memref<32x128xf32, #tpu.memory_space<vmem>>, %arg6: memref<8x128xf32, #tpu.memory_space<vmem>>) attributes {dimension_semantics = [#tpu.dimension_semantics<parallel>], iteration_bounds = array<i64: 1>, scalar_prefetch = 0 : i64, scratch_operands = 0 : i64, tpu.core_type = #tpu.core_type<tc>, window_params = [{transform_indices = @transform_0, window_bounds = array<i64: 8, 8, 16>}, {pipeline_mode = #tpu.pipeline_mode<synchronous>, transform_indices = @transform_1, window_bounds = array<i64: 16, 128>}, {pipeline_mode = #tpu.pipeline_mode<synchronous>, transform_indices = @transform_2, window_bounds = array<i64: 32, 128>}, {pipeline_mode = #tpu.pipeline_mode<synchronous>, transform_indices = @transform_3, window_bounds = array<i64: 1, 128>}, {pipeline_mode = #tpu.pipeline_mode<synchronous>, transform_indices = @transform_4, window_bounds = array<i64: 32, 128>}, {transform_indices = @transform_5, window_bounds = array<i64: 8, 128>}]} {
    %c0 = arith.constant 0 : index
    %c0_0 = arith.constant 0 : index
    %c0_1 = arith.constant 0 : index
    %0 = vector.load %arg1[%c0, %c0_0, %c0_1] : memref<8x8x16xf32, #tpu.memory_space<vmem>>, vector<8x8x16xf32>
    %1 = vector.shape_cast %0 : vector<8x8x16xf32> to vector<64x16xf32>
    %c0_2 = arith.constant 0 : index
    %c0_3 = arith.constant 0 : index
    %2 = vector.load %arg2[%c0_2, %c0_3] : memref<16x128xf32, #tpu.memory_space<vmem>>, vector<16x128xf32>
    %cst = arith.constant dense<0.000000e+00> : vector<64x128xf32>
    %3 = tpu.matmul %1, %2, %cst {dimension_numbers = #tpu.dot_dimension_numbers<[1], [0], [0], [1], [0, 0, 1, 1], [], []>} : vector<64x16xf32>, vector<16x128xf32>, vector<64x128xf32> -> vector<64x128xf32>
    %c0_4 = arith.constant 0 : index
    %c0_5 = arith.constant 0 : index
    %4 = vector.load %arg4[%c0_4, %c0_5] : memref<1x128xf32, #tpu.memory_space<vmem>>, vector<1x128xf32>
    %5 = vector.broadcast %4 : vector<1x128xf32> to vector<64x128xf32>
    %6 = arith.addf %3, %5 : vector<64x128xf32>
    %7 = vector.shape_cast %6 : vector<64x128xf32> to vector<8x8x128xf32>
    %c0_6 = arith.constant 0 : index
    %c0_7 = arith.constant 0 : index
    %8 = vector.load %arg3[%c0_6, %c0_7] : memref<32x128xf32, #tpu.memory_space<vmem>>, vector<32x128xf32>
    %9 = tpu.iota {dimensions = array<i32: 1>} : vector<8x128xi32>
    %c64_i32 = arith.constant 64 : i32
    %10 = vector.broadcast %c64_i32 : i32 to vector<8x128xi32>
    %11 = arith.cmpi sge, %9, %10 : vector<8x128xi32>
    %c96_i32 = arith.constant 96 : i32
    %12 = vector.broadcast %c96_i32 : i32 to vector<8x128xi32>
    %13 = arith.cmpi slt, %9, %12 : vector<8x128xi32>
    %14 = arith.andi %11, %13 : vector<8x128xi1>
    %cst_8 = arith.constant 0.000000e+00 : f32
    %15 = vector.broadcast %cst_8 : f32 to vector<8x32xf32>
    %cst_9 = arith.constant 0.000000e+00 : f32
    %16 = vector.broadcast %cst_9 : f32 to vector<8x32xf32>
    %17 = vector.extract_strided_slice %7 {offsets = [0, 0, 0], sizes = [8, 1, 128], strides = [1, 1, 1]} : vector<8x8x128xf32> to vector<8x1x128xf32>
    %18 = vector.shape_cast %17 : vector<8x1x128xf32> to vector<8x128xf32>
    %cst_10 = arith.constant dense<0.000000e+00> : vector<8x128xf32>
    %19 = tpu.matmul %15, %8, %cst_10 {dimension_numbers = #tpu.dot_dimension_numbers<[1], [0], [0], [1], [0, 0, 1, 1], [], []>} : vector<8x32xf32>, vector<32x128xf32>, vector<8x128xf32> -> vector<8x128xf32>
    %20 = arith.addf %18, %19 : vector<8x128xf32>
    %21 = math.tanh %20 : vector<8x128xf32>
    %22 = arith.negf %20 : vector<8x128xf32>
    %23 = math.exp %22 : vector<8x128xf32>
    %cst_11 = arith.constant 1.000000e+00 : f32
    %24 = vector.broadcast %cst_11 : f32 to vector<8x128xf32>
    %25 = arith.addf %24, %23 : vector<8x128xf32>
    %26 = arith.divf %24, %25 : vector<8x128xf32>
    %27 = arith.select %14, %21, %26 : vector<8x128xi1>, vector<8x128xf32>
    %28 = vector.extract_strided_slice %27 {offsets = [0, 0], sizes = [8, 32], strides = [1, 1]} : vector<8x128xf32> to vector<8x32xf32>
    %29 = vector.extract_strided_slice %27 {offsets = [0, 32], sizes = [8, 32], strides = [1, 1]} : vector<8x128xf32> to vector<8x32xf32>
    %30 = vector.extract_strided_slice %27 {offsets = [0, 64], sizes = [8, 32], strides = [1, 1]} : vector<8x128xf32> to vector<8x32xf32>
    %31 = vector.extract_strided_slice %27 {offsets = [0, 96], sizes = [8, 32], strides = [1, 1]} : vector<8x128xf32> to vector<8x32xf32>
    %32 = arith.mulf %29, %16 : vector<8x32xf32>
    %33 = arith.mulf %28, %30 : vector<8x32xf32>
    %34 = arith.addf %32, %33 : vector<8x32xf32>
    %35 = math.tanh %34 : vector<8x32xf32>
    %36 = arith.mulf %31, %35 : vector<8x32xf32>
    %37 = vector.extract_strided_slice %7 {offsets = [0, 1, 0], sizes = [8, 1, 128], strides = [1, 1, 1]} : vector<8x8x128xf32> to vector<8x1x128xf32>
    %38 = vector.shape_cast %37 : vector<8x1x128xf32> to vector<8x128xf32>
    %cst_12 = arith.constant dense<0.000000e+00> : vector<8x128xf32>
    %39 = tpu.matmul %36, %8, %cst_12 {dimension_numbers = #tpu.dot_dimension_numbers<[1], [0], [0], [1], [0, 0, 1, 1], [], []>} : vector<8x32xf32>, vector<32x128xf32>, vector<8x128xf32> -> vector<8x128xf32>
    %40 = arith.addf %38, %39 : vector<8x128xf32>
    %41 = math.tanh %40 : vector<8x128xf32>
    %42 = arith.negf %40 : vector<8x128xf32>
    %43 = math.exp %42 : vector<8x128xf32>
    %cst_13 = arith.constant 1.000000e+00 : f32
    %44 = vector.broadcast %cst_13 : f32 to vector<8x128xf32>
    %45 = arith.addf %44, %43 : vector<8x128xf32>
    %46 = arith.divf %44, %45 : vector<8x128xf32>
    %47 = arith.select %14, %41, %46 : vector<8x128xi1>, vector<8x128xf32>
    %48 = vector.extract_strided_slice %47 {offsets = [0, 0], sizes = [8, 32], strides = [1, 1]} : vector<8x128xf32> to vector<8x32xf32>
    %49 = vector.extract_strided_slice %47 {offsets = [0, 32], sizes = [8, 32], strides = [1, 1]} : vector<8x128xf32> to vector<8x32xf32>
    %50 = vector.extract_strided_slice %47 {offsets = [0, 64], sizes = [8, 32], strides = [1, 1]} : vector<8x128xf32> to vector<8x32xf32>
    %51 = vector.extract_strided_slice %47 {offsets = [0, 96], sizes = [8, 32], strides = [1, 1]} : vector<8x128xf32> to vector<8x32xf32>
    %52 = arith.mulf %49, %34 : vector<8x32xf32>
    %53 = arith.mulf %48, %50 : vector<8x32xf32>
    %54 = arith.addf %52, %53 : vector<8x32xf32>
    %55 = math.tanh %54 : vector<8x32xf32>
    %56 = arith.mulf %51, %55 : vector<8x32xf32>
    %57 = vector.extract_strided_slice %7 {offsets = [0, 2, 0], sizes = [8, 1, 128], strides = [1, 1, 1]} : vector<8x8x128xf32> to vector<8x1x128xf32>
    %58 = vector.shape_cast %57 : vector<8x1x128xf32> to vector<8x128xf32>
    %cst_14 = arith.constant dense<0.000000e+00> : vector<8x128xf32>
    %59 = tpu.matmul %56, %8, %cst_14 {dimension_numbers = #tpu.dot_dimension_numbers<[1], [0], [0], [1], [0, 0, 1, 1], [], []>} : vector<8x32xf32>, vector<32x128xf32>, vector<8x128xf32> -> vector<8x128xf32>
    %60 = arith.addf %58, %59 : vector<8x128xf32>
    %61 = math.tanh %60 : vector<8x128xf32>
    %62 = arith.negf %60 : vector<8x128xf32>
    %63 = math.exp %62 : vector<8x128xf32>
    %cst_15 = arith.constant 1.000000e+00 : f32
    %64 = vector.broadcast %cst_15 : f32 to vector<8x128xf32>
    %65 = arith.addf %64, %63 : vector<8x128xf32>
    %66 = arith.divf %64, %65 : vector<8x128xf32>
    %67 = arith.select %14, %61, %66 : vector<8x128xi1>, vector<8x128xf32>
    %68 = vector.extract_strided_slice %67 {offsets = [0, 0], sizes = [8, 32], strides = [1, 1]} : vector<8x128xf32> to vector<8x32xf32>
    %69 = vector.extract_strided_slice %67 {offsets = [0, 32], sizes = [8, 32], strides = [1, 1]} : vector<8x128xf32> to vector<8x32xf32>
    %70 = vector.extract_strided_slice %67 {offsets = [0, 64], sizes = [8, 32], strides = [1, 1]} : vector<8x128xf32> to vector<8x32xf32>
    %71 = vector.extract_strided_slice %67 {offsets = [0, 96], sizes = [8, 32], strides = [1, 1]} : vector<8x128xf32> to vector<8x32xf32>
    %72 = arith.mulf %69, %54 : vector<8x32xf32>
    %73 = arith.mulf %68, %70 : vector<8x32xf32>
    %74 = arith.addf %72, %73 : vector<8x32xf32>
    %75 = math.tanh %74 : vector<8x32xf32>
    %76 = arith.mulf %71, %75 : vector<8x32xf32>
    %77 = vector.extract_strided_slice %7 {offsets = [0, 3, 0], sizes = [8, 1, 128], strides = [1, 1, 1]} : vector<8x8x128xf32> to vector<8x1x128xf32>
    %78 = vector.shape_cast %77 : vector<8x1x128xf32> to vector<8x128xf32>
    %cst_16 = arith.constant dense<0.000000e+00> : vector<8x128xf32>
    %79 = tpu.matmul %76, %8, %cst_16 {dimension_numbers = #tpu.dot_dimension_numbers<[1], [0], [0], [1], [0, 0, 1, 1], [], []>} : vector<8x32xf32>, vector<32x128xf32>, vector<8x128xf32> -> vector<8x128xf32>
    %80 = arith.addf %78, %79 : vector<8x128xf32>
    %81 = math.tanh %80 : vector<8x128xf32>
    %82 = arith.negf %80 : vector<8x128xf32>
    %83 = math.exp %82 : vector<8x128xf32>
    %cst_17 = arith.constant 1.000000e+00 : f32
    %84 = vector.broadcast %cst_17 : f32 to vector<8x128xf32>
    %85 = arith.addf %84, %83 : vector<8x128xf32>
    %86 = arith.divf %84, %85 : vector<8x128xf32>
    %87 = arith.select %14, %81, %86 : vector<8x128xi1>, vector<8x128xf32>
    %88 = vector.extract_strided_slice %87 {offsets = [0, 0], sizes = [8, 32], strides = [1, 1]} : vector<8x128xf32> to vector<8x32xf32>
    %89 = vector.extract_strided_slice %87 {offsets = [0, 32], sizes = [8, 32], strides = [1, 1]} : vector<8x128xf32> to vector<8x32xf32>
    %90 = vector.extract_strided_slice %87 {offsets = [0, 64], sizes = [8, 32], strides = [1, 1]} : vector<8x128xf32> to vector<8x32xf32>
    %91 = vector.extract_strided_slice %87 {offsets = [0, 96], sizes = [8, 32], strides = [1, 1]} : vector<8x128xf32> to vector<8x32xf32>
    %92 = arith.mulf %89, %74 : vector<8x32xf32>
    %93 = arith.mulf %88, %90 : vector<8x32xf32>
    %94 = arith.addf %92, %93 : vector<8x32xf32>
    %95 = math.tanh %94 : vector<8x32xf32>
    %96 = arith.mulf %91, %95 : vector<8x32xf32>
    %97 = vector.extract_strided_slice %7 {offsets = [0, 4, 0], sizes = [8, 1, 128], strides = [1, 1, 1]} : vector<8x8x128xf32> to vector<8x1x128xf32>
    %98 = vector.shape_cast %97 : vector<8x1x128xf32> to vector<8x128xf32>
    %cst_18 = arith.constant dense<0.000000e+00> : vector<8x128xf32>
    %99 = tpu.matmul %96, %8, %cst_18 {dimension_numbers = #tpu.dot_dimension_numbers<[1], [0], [0], [1], [0, 0, 1, 1], [], []>} : vector<8x32xf32>, vector<32x128xf32>, vector<8x128xf32> -> vector<8x128xf32>
    %100 = arith.addf %98, %99 : vector<8x128xf32>
    %101 = math.tanh %100 : vector<8x128xf32>
    %102 = arith.negf %100 : vector<8x128xf32>
    %103 = math.exp %102 : vector<8x128xf32>
    %cst_19 = arith.constant 1.000000e+00 : f32
    %104 = vector.broadcast %cst_19 : f32 to vector<8x128xf32>
    %105 = arith.addf %104, %103 : vector<8x128xf32>
    %106 = arith.divf %104, %105 : vector<8x128xf32>
    %107 = arith.select %14, %101, %106 : vector<8x128xi1>, vector<8x128xf32>
    %108 = vector.extract_strided_slice %107 {offsets = [0, 0], sizes = [8, 32], strides = [1, 1]} : vector<8x128xf32> to vector<8x32xf32>
    %109 = vector.extract_strided_slice %107 {offsets = [0, 32], sizes = [8, 32], strides = [1, 1]} : vector<8x128xf32> to vector<8x32xf32>
    %110 = vector.extract_strided_slice %107 {offsets = [0, 64], sizes = [8, 32], strides = [1, 1]} : vector<8x128xf32> to vector<8x32xf32>
    %111 = vector.extract_strided_slice %107 {offsets = [0, 96], sizes = [8, 32], strides = [1, 1]} : vector<8x128xf32> to vector<8x32xf32>
    %112 = arith.mulf %109, %94 : vector<8x32xf32>
    %113 = arith.mulf %108, %110 : vector<8x32xf32>
    %114 = arith.addf %112, %113 : vector<8x32xf32>
    %115 = math.tanh %114 : vector<8x32xf32>
    %116 = arith.mulf %111, %115 : vector<8x32xf32>
    %117 = vector.extract_strided_slice %7 {offsets = [0, 5, 0], sizes = [8, 1, 128], strides = [1, 1, 1]} : vector<8x8x128xf32> to vector<8x1x128xf32>
    %118 = vector.shape_cast %117 : vector<8x1x128xf32> to vector<8x128xf32>
    %cst_20 = arith.constant dense<0.000000e+00> : vector<8x128xf32>
    %119 = tpu.matmul %116, %8, %cst_20 {dimension_numbers = #tpu.dot_dimension_numbers<[1], [0], [0], [1], [0, 0, 1, 1], [], []>} : vector<8x32xf32>, vector<32x128xf32>, vector<8x128xf32> -> vector<8x128xf32>
    %120 = arith.addf %118, %119 : vector<8x128xf32>
    %121 = math.tanh %120 : vector<8x128xf32>
    %122 = arith.negf %120 : vector<8x128xf32>
    %123 = math.exp %122 : vector<8x128xf32>
    %cst_21 = arith.constant 1.000000e+00 : f32
    %124 = vector.broadcast %cst_21 : f32 to vector<8x128xf32>
    %125 = arith.addf %124, %123 : vector<8x128xf32>
    %126 = arith.divf %124, %125 : vector<8x128xf32>
    %127 = arith.select %14, %121, %126 : vector<8x128xi1>, vector<8x128xf32>
    %128 = vector.extract_strided_slice %127 {offsets = [0, 0], sizes = [8, 32], strides = [1, 1]} : vector<8x128xf32> to vector<8x32xf32>
    %129 = vector.extract_strided_slice %127 {offsets = [0, 32], sizes = [8, 32], strides = [1, 1]} : vector<8x128xf32> to vector<8x32xf32>
    %130 = vector.extract_strided_slice %127 {offsets = [0, 64], sizes = [8, 32], strides = [1, 1]} : vector<8x128xf32> to vector<8x32xf32>
    %131 = vector.extract_strided_slice %127 {offsets = [0, 96], sizes = [8, 32], strides = [1, 1]} : vector<8x128xf32> to vector<8x32xf32>
    %132 = arith.mulf %129, %114 : vector<8x32xf32>
    %133 = arith.mulf %128, %130 : vector<8x32xf32>
    %134 = arith.addf %132, %133 : vector<8x32xf32>
    %135 = math.tanh %134 : vector<8x32xf32>
    %136 = arith.mulf %131, %135 : vector<8x32xf32>
    %137 = vector.extract_strided_slice %7 {offsets = [0, 6, 0], sizes = [8, 1, 128], strides = [1, 1, 1]} : vector<8x8x128xf32> to vector<8x1x128xf32>
    %138 = vector.shape_cast %137 : vector<8x1x128xf32> to vector<8x128xf32>
    %cst_22 = arith.constant dense<0.000000e+00> : vector<8x128xf32>
    %139 = tpu.matmul %136, %8, %cst_22 {dimension_numbers = #tpu.dot_dimension_numbers<[1], [0], [0], [1], [0, 0, 1, 1], [], []>} : vector<8x32xf32>, vector<32x128xf32>, vector<8x128xf32> -> vector<8x128xf32>
    %140 = arith.addf %138, %139 : vector<8x128xf32>
    %141 = math.tanh %140 : vector<8x128xf32>
    %142 = arith.negf %140 : vector<8x128xf32>
    %143 = math.exp %142 : vector<8x128xf32>
    %cst_23 = arith.constant 1.000000e+00 : f32
    %144 = vector.broadcast %cst_23 : f32 to vector<8x128xf32>
    %145 = arith.addf %144, %143 : vector<8x128xf32>
    %146 = arith.divf %144, %145 : vector<8x128xf32>
    %147 = arith.select %14, %141, %146 : vector<8x128xi1>, vector<8x128xf32>
    %148 = vector.extract_strided_slice %147 {offsets = [0, 0], sizes = [8, 32], strides = [1, 1]} : vector<8x128xf32> to vector<8x32xf32>
    %149 = vector.extract_strided_slice %147 {offsets = [0, 32], sizes = [8, 32], strides = [1, 1]} : vector<8x128xf32> to vector<8x32xf32>
    %150 = vector.extract_strided_slice %147 {offsets = [0, 64], sizes = [8, 32], strides = [1, 1]} : vector<8x128xf32> to vector<8x32xf32>
    %151 = vector.extract_strided_slice %147 {offsets = [0, 96], sizes = [8, 32], strides = [1, 1]} : vector<8x128xf32> to vector<8x32xf32>
    %152 = arith.mulf %149, %134 : vector<8x32xf32>
    %153 = arith.mulf %148, %150 : vector<8x32xf32>
    %154 = arith.addf %152, %153 : vector<8x32xf32>
    %155 = math.tanh %154 : vector<8x32xf32>
    %156 = arith.mulf %151, %155 : vector<8x32xf32>
    %157 = vector.extract_strided_slice %7 {offsets = [0, 7, 0], sizes = [8, 1, 128], strides = [1, 1, 1]} : vector<8x8x128xf32> to vector<8x1x128xf32>
    %158 = vector.shape_cast %157 : vector<8x1x128xf32> to vector<8x128xf32>
    %cst_24 = arith.constant dense<0.000000e+00> : vector<8x128xf32>
    %159 = tpu.matmul %156, %8, %cst_24 {dimension_numbers = #tpu.dot_dimension_numbers<[1], [0], [0], [1], [0, 0, 1, 1], [], []>} : vector<8x32xf32>, vector<32x128xf32>, vector<8x128xf32> -> vector<8x128xf32>
    %160 = arith.addf %158, %159 : vector<8x128xf32>
    %161 = math.tanh %160 : vector<8x128xf32>
    %162 = arith.negf %160 : vector<8x128xf32>
    %163 = math.exp %162 : vector<8x128xf32>
    %cst_25 = arith.constant 1.000000e+00 : f32
    %164 = vector.broadcast %cst_25 : f32 to vector<8x128xf32>
    %165 = arith.addf %164, %163 : vector<8x128xf32>
    %166 = arith.divf %164, %165 : vector<8x128xf32>
    %167 = arith.select %14, %161, %166 : vector<8x128xi1>, vector<8x128xf32>
    %168 = vector.extract_strided_slice %167 {offsets = [0, 0], sizes = [8, 32], strides = [1, 1]} : vector<8x128xf32> to vector<8x32xf32>
    %169 = vector.extract_strided_slice %167 {offsets = [0, 32], sizes = [8, 32], strides = [1, 1]} : vector<8x128xf32> to vector<8x32xf32>
    %170 = vector.extract_strided_slice %167 {offsets = [0, 64], sizes = [8, 32], strides = [1, 1]} : vector<8x128xf32> to vector<8x32xf32>
    %171 = vector.extract_strided_slice %167 {offsets = [0, 96], sizes = [8, 32], strides = [1, 1]} : vector<8x128xf32> to vector<8x32xf32>
    %172 = arith.mulf %169, %154 : vector<8x32xf32>
    %173 = arith.mulf %168, %170 : vector<8x32xf32>
    %174 = arith.addf %172, %173 : vector<8x32xf32>
    %175 = math.tanh %174 : vector<8x32xf32>
    %176 = arith.mulf %171, %175 : vector<8x32xf32>
    %c0_26 = arith.constant 0 : index
    %c0_27 = arith.constant 0 : index
    %177 = vector.load %arg5[%c0_26, %c0_27] : memref<32x128xf32, #tpu.memory_space<vmem>>, vector<32x128xf32>
    %cst_28 = arith.constant dense<0.000000e+00> : vector<8x128xf32>
    %178 = tpu.matmul %176, %177, %cst_28 {dimension_numbers = #tpu.dot_dimension_numbers<[1], [0], [0], [1], [0, 0, 1, 1], [], []>} : vector<8x32xf32>, vector<32x128xf32>, vector<8x128xf32> -> vector<8x128xf32>
    %c0_29 = arith.constant 0 : index
    %c0_30 = arith.constant 0 : index
    %179 = vector.load %arg6[%c0_29, %c0_30] : memref<8x128xf32, #tpu.memory_space<vmem>>, vector<8x128xf32>
    tpu.vector_store %arg6[%c0_29, %c0_30], %178 {strides = array<i32>} : memref<8x128xf32, #tpu.memory_space<vmem>>, vector<8x128xf32>,
    return
  }
  func.func @transform_0(%arg0: i32) -> (i32, i32, i32) {
    %c0_i32 = arith.constant 0 : i32
    %c0_i32_0 = arith.constant 0 : i32
    %c0_i32_1 = arith.constant 0 : i32
    return %arg0, %c0_i32, %c0_i32_0 : i32, i32, i32
  }
  func.func @transform_1(%arg0: i32) -> (i32, i32) {
    %c0_i32 = arith.constant 0 : i32
    %c0_i32_0 = arith.constant 0 : i32
    %c0_i32_1 = arith.constant 0 : i32
    return %c0_i32, %c0_i32_0 : i32, i32
  }
  func.func @transform_2(%arg0: i32) -> (i32, i32) {
    %c0_i32 = arith.constant 0 : i32
    %c0_i32_0 = arith.constant 0 : i32
    %c0_i32_1 = arith.constant 0 : i32
    return %c0_i32, %c0_i32_0 : i32, i32
  }
  func.func @transform_3(%arg0: i32) -> (i32, i32) {
    %c0_i32 = arith.constant 0 : i32
    %c0_i32_0 = arith.constant 0 : i32
    %c0_i32_1 = arith.constant 0 : i32
    return %c0_i32, %c0_i32_0 : i32, i32
  }
  func.func @transform_4(%arg0: i32) -> (i32, i32) {
    %c0_i32 = arith.constant 0 : i32
    %c0_i32_0 = arith.constant 0 : i32
    %c0_i32_1 = arith.constant 0 : i32
    return %c0_i32, %c0_i32_0 : i32, i32
  }
  func.func @transform_5(%arg0: i32) -> (i32, i32) {
    %c0_i32 = arith.constant 0 : i32
    %c0_i32_0 = arith.constant 0 : i32
    return %arg0, %c0_i32 : i32, i32
  }
}

</mosaic_0001>

<llo_original>
// kernel: tpu_custom_call.1
$region0: #{tpu_custom_call.1}
  #allocation0 [shape = 'u32[]', space=smem, size = 0x4, offset = 0x4, fixed_abs, tag = 'smem constant byte address 0x4 - core index']
  #allocation1 [shape = 'u32[72,128]{1,0:T(1,128)}', space=vmem, size = 0x9000, scoped, tag = 'internal scratch']
  %s0 = inlined_call_operand.hbm [shape: f32[8,8,16], index: 0, kind: input, shape index: {}]
  %s1 = inlined_call_operand.hbm [shape: f32[16,128], index: 1, kind: input, shape index: {}]
  %s2 = inlined_call_operand.hbm [shape: f32[32,128], index: 2, kind: input, shape index: {}]
  %s3 = inlined_call_operand.vmem [shape: f32[1,128], index: 3, kind: input, shape index: {}]
  %s4 = inlined_call_operand.hbm [shape: f32[32,128], index: 4, kind: input, shape index: {}]
  %s5 = inlined_call_operand.hbm [shape: f32[8,128], index: 5, kind: output, shape index: {}]
  %s6 = sld [smem:[#allocation0]]
  $region46: #{tpu_custom_call.1} parent=0
    _
  %s8 = ssub.s32 1, %s6
  %s9 = scalar_select 0, %s8, %s6
  $region1: #{tpu_custom_call.1} parent=0
    #allocation2 [shape = 'u8[32768]{0}', space=vmem, size = 0x8000, scoped, tag = 'input window, operand 0, single buffered']
    #allocation3 [shape = 's32[1]{0}', space=sflag, size = 0x4, scoped, tag = 'scoped memory for tpu_custom_call.1']
    #allocation4 [shape = 's32[1]{0}', space=sflag, size = 0x4, scoped, tag = 'scoped memory for tpu_custom_call.1']
    #allocation5 [shape = 'u8[8192]{0}', space=vmem, size = 0x2000, scoped, tag = 'input window, operand 1, single buffered']
    #allocation6 [shape = 's32[1]{0}', space=sflag, size = 0x4, scoped, tag = 'scoped memory for tpu_custom_call.1']
    #allocation7 [shape = 'u8[16384]{0}', space=vmem, size = 0x4000, scoped, tag = 'input window, operand 2, single buffered']
    #allocation8 [shape = 'u8[16384]{0}', space=vmem, size = 0x4000, scoped, tag = 'input window, operand 4, single buffered']
    #allocation9 [shape = 's32[1]{0}', space=sflag, size = 0x4, scoped, tag = 'scoped memory for tpu_custom_call.1']
    #allocation10 [shape = 'u8[4096]{0}', space=vmem, size = 0x1000, scoped, tag = 'output window, operand 0, single buffered']
    %10 = vsyncpa [#allocation3], 0
    %11 = vsyncpa [#allocation6], 0
    %12 = vsyncpa [#allocation9], 0
    %13 = vsyncpa [#allocation4], 0
    // Predicated region
    $region2: #{tpu_custom_call.1} parent=1 // pred_check
      _
    $region3: #{tpu_custom_call.1} parent=1 // pred_check_branch
      %15 = sbr.rel (0) target = $region5
    $region4: #{tpu_custom_call.1} parent=1 // pred_region
      %17 = vsyncadd [#allocation3], 0
      %s18 = sshll.u32 %s0, 4
      %s19 = int_to_ptr.hbm [resolvable:$true] %s18
      %s20 = sshll.u32 [#allocation2], 4
      %s21 = int_to_ptr.vmem [resolvable:$true] %s20
      %26 = dma.hbm_to_vmem [thread:$0]  %s19, 1024, %s21, [#allocation3], 128, 128, 8
    $region5: #{tpu_custom_call.1} parent=1 // pred_fallthru
      _
    // Predicated region
    $region6: #{tpu_custom_call.1} parent=1 // pred_check
      _
    $region7: #{tpu_custom_call.1} parent=1 // pred_check_branch
      %28 = sbr.rel (0) target = $region9
    $region8: #{tpu_custom_call.1} parent=1 // pred_region
      %30 = vsyncadd [#allocation6], 0
      %s31 = sshll.u32 %s1, 4
      %s32 = int_to_ptr.hbm [resolvable:$true] %s31
      %s33 = sshll.u32 [#allocation5], 4
      %s34 = int_to_ptr.vmem [resolvable:$true] %s33
      %39 = dma.hbm_to_vmem [thread:$0]  %s32, 256, %s34, [#allocation6], 128, 128, 8
    $region9: #{tpu_custom_call.1} parent=1 // pred_fallthru
      _
    // Predicated region
    $region10: #{tpu_custom_call.1} parent=1 // pred_check
      _
    $region11: #{tpu_custom_call.1} parent=1 // pred_check_branch
      %41 = sbr.rel (0) target = $region13
    $region12: #{tpu_custom_call.1} parent=1 // pred_region
      %43 = vsyncadd [#allocation6], 0
      %s44 = sshll.u32 %s2, 4
      %s45 = int_to_ptr.hbm [resolvable:$true] %s44
      %s46 = sshll.u32 [#allocation7], 4
      %s47 = int_to_ptr.vmem [resolvable:$true] %s46
      %52 = dma.hbm_to_vmem [thread:$0]  %s45, 512, %s47, [#allocation6], 128, 128, 8
    $region13: #{tpu_custom_call.1} parent=1 // pred_fallthru
      _
    // Predicated region
    $region14: #{tpu_custom_call.1} parent=1 // pred_check
      _
    $region15: #{tpu_custom_call.1} parent=1 // pred_check_branch
      %54 = sbr.rel (0) target = $region17
    $region16: #{tpu_custom_call.1} parent=1 // pred_region
      _
    $region17: #{tpu_custom_call.1} parent=1 // pred_fallthru
      _
    // Predicated region
    $region18: #{tpu_custom_call.1} parent=1 // pred_check
      _
    $region19: #{tpu_custom_call.1} parent=1 // pred_check_branch
      %56 = sbr.rel (0) target = $region21
    $region20: #{tpu_custom_call.1} parent=1 // pred_region
      %58 = vsyncadd [#allocation9], 0
      %s59 = sshll.u32 %s4, 4
      %s60 = int_to_ptr.hbm [resolvable:$true] %s59
      %s61 = sshll.u32 [#allocation8], 4
      %s62 = int_to_ptr.vmem [resolvable:$true] %s61
      %67 = dma.hbm_to_vmem [thread:$0]  %s60, 512, %s62, [#allocation9], 128, 128, 8
    $region21: #{tpu_custom_call.1} parent=1 // pred_fallthru
      _
    // Predicated region
    $region22: #{tpu_custom_call.1} parent=1 // pred_check
      _
    $region23: #{tpu_custom_call.1} parent=1 // pred_check_branch
      %69 = sbr.rel (0) target = $region25
    $region24: #{tpu_custom_call.1} parent=1 // pred_region
      %71 = dma.done [#allocation3], 1024
    $region25: #{tpu_custom_call.1} parent=1 // pred_fallthru
      _
    // Predicated region
    $region26: #{tpu_custom_call.1} parent=1 // pred_check
      _
    $region27: #{tpu_custom_call.1} parent=1 // pred_check_branch
      %73 = sbr.rel (0) target = $region29
    $region28: #{tpu_custom_call.1} parent=1 // pred_region
      %75 = dma.done [#allocation6], 256
    $region29: #{tpu_custom_call.1} parent=1 // pred_fallthru
      _
    // Predicated region
    $region30: #{tpu_custom_call.1} parent=1 // pred_check
      _
    $region31: #{tpu_custom_call.1} parent=1 // pred_check_branch
      %77 = sbr.rel (0) target = $region33
    $region32: #{tpu_custom_call.1} parent=1 // pred_region
      %79 = dma.done [#allocation6], 512
    $region33: #{tpu_custom_call.1} parent=1 // pred_fallthru
      _
    // Predicated region
    $region34: #{tpu_custom_call.1} parent=1 // pred_check
      _
    $region35: #{tpu_custom_call.1} parent=1 // pred_check_branch
      %81 = sbr.rel (0) target = $region37
    $region36: #{tpu_custom_call.1} parent=1 // pred_region
      %83 = dma.done [#allocation9], 512
    $region37: #{tpu_custom_call.1} parent=1 // pred_fallthru
      _
    %v84 = vld [vmem:[#allocation2] sm:$0xff]
    %v85 = vld [vmem:[#allocation2 + $0x8] sm:$0xff]
    %v86 = vld [vmem:[#allocation2 + $0x10] sm:$0xff]
    %v87 = vld [vmem:[#allocation2 + $0x18] sm:$0xff]
    %v88 = vld [vmem:[#allocation2 + $0x20] sm:$0xff]
    %v89 = vld [vmem:[#allocation2 + $0x28] sm:$0xff]
    %v90 = vld [vmem:[#allocation2 + $0x30] sm:$0xff]
    %v91 = vld [vmem:[#allocation2 + $0x38] sm:$0xff]
    %v92 = vld [vmem:[#allocation5] sm:$0xff]
    %v93 = vld [vmem:[#allocation5 + $0x8] sm:$0xff]
    %v94 = vld [vmem:[%s3] sm:$0x1]
    %v96 = vperm.slane %v94, 0
    %vm98 = vcmask 130048
    %v100 = vsel %vm98, %v84, 0
    %v103 = vsel %vm98, %v85, 0
    %v106 = vsel %vm98, %v86, 0
    %v109 = vsel %vm98, %v87, 0
    %v112 = vsel %vm98, %v88, 0
    %v115 = vsel %vm98, %v89, 0
    %v118 = vsel %vm98, %v90, 0
    %v121 = vsel %vm98, %v91, 0
    %123 = vmatpush.msra.mxu0 0.0
    %124 = vmatpush.msra.mxu0 0.0
    %125 = vmatpush.msra.mxu0 0.0
    %126 = vmatpush.msra.mxu0 0.0
    %127 = vmatpush.msra.mxu0 0.0
    %128 = vmatpush.msra.mxu0 0.0
    %129 = vmatpush.msra.mxu0 0.0
    %130 = vmatpush.msra.mxu0 0.0
    %131 = vmatpush.msra.mxu0 0.0
    %132 = vmatpush.msra.mxu0 0.0
    %133 = vmatpush.msra.mxu0 0.0
    %134 = vmatpush.msra.mxu0 0.0
    %135 = vmatpush.msra.mxu0 0.0
    %136 = vmatpush.msra.mxu0 0.0
    %137 = vmatpush.msra.mxu0 %v93
    %138 = vmatpush.msra.mxu0 %v92
    %139 = vmatmul.f32.gmra.mxu0 %v100
    %v140 = vpop.f32.mrf.mxu0
    %v141 = vadd.f32 %v96, %v140
    %142 = vmatmul.f32.gmra.mxu0 %v103
    %v143 = vpop.f32.mrf.mxu0
    %v144 = vadd.f32 %v96, %v143
    %145 = vmatmul.f32.gmra.mxu0 %v106
    %v146 = vpop.f32.mrf.mxu0
    %v147 = vadd.f32 %v96, %v146
    %148 = vmatmul.f32.gmra.mxu0 %v109
    %v149 = vpop.f32.mrf.mxu0
    %v150 = vadd.f32 %v96, %v149
    %151 = vmatmul.f32.gmra.mxu0 %v112
    %v152 = vpop.f32.mrf.mxu0
    %v153 = vadd.f32 %v96, %v152
    %154 = vmatmul.f32.gmra.mxu0 %v115
    %v155 = vpop.f32.mrf.mxu0
    %v156 = vadd.f32 %v96, %v155
    %157 = vmatmul.f32.gmra.mxu0 %v118
    %v158 = vpop.f32.mrf.mxu0
    %v159 = vadd.f32 %v96, %v158
    %160 = vmatmul.f32.gmra.mxu0 %v121
    %v161 = vpop.f32.mrf.mxu0
    %v162 = vadd.f32 %v96, %v161
    %163 = vdwg.mxu0
    %v164 = vld [vmem:[#allocation7] sm:$0xff]
    %v165 = vld [vmem:[#allocation7 + $0x8] sm:$0xff]
    %v166 = vld [vmem:[#allocation7 + $0x10] sm:$0xff]
    %v167 = vld [vmem:[#allocation7 + $0x18] sm:$0xff]
    %v168 = vlaneseq
    %v169 = vand.u32 %v168, 127
    %vm170 = vcmp.ge.s32.totalorder %v169, 64
    %vm171 = vcmp.lt.s32.totalorder %v169, 96
    %vm172 = vmand %vm170, %vm171
    %vm173 = vcmask 261120
    %v175 = vsel %vm173, 0.0, 0
    %177 = vmatpush.msra.mxu0 0.0
    %178 = vmatpush.msra.mxu0 0.0
    %179 = vmatpush.msra.mxu0 0.0
    %180 = vmatpush.msra.mxu0 0.0
    %181 = vmatpush.msra.mxu0 0.0
    %182 = vmatpush.msra.mxu0 0.0
    %183 = vmatpush.msra.mxu0 0.0
    %184 = vmatpush.msra.mxu0 0.0
    %185 = vmatpush.msra.mxu0 0.0
    %186 = vmatpush.msra.mxu0 0.0
    %187 = vmatpush.msra.mxu0 0.0
    %188 = vmatpush.msra.mxu0 0.0
    %189 = vmatpush.msra.mxu0 %v167
    %190 = vmatpush.msra.mxu0 %v166
    %191 = vmatpush.msra.mxu0 %v165
    %192 = vmatpush.msra.mxu0 %v164
    %193 = vmatmul.f32.gmra.mxu0 %v175
    %v194 = vpop.f32.mrf.mxu0
    %v195 = vadd.f32 0.0, %v194
    %196 = vdwg.mxu0
    %v198 = vrot.slane %v195, 1
    %v199 = vrot.slane %v195, 2
    %v200 = vrot.slane %v195, 3
    %v201 = vrot.slane %v195, 4
    %v202 = vrot.slane %v195, 5
    %v203 = vrot.slane %v195, 6
    %v204 = vrot.slane %v195, 7
    %v213 = vadd.f32 %v141, %v195
    %v214 = vadd.f32 %v144, %v198
    %v215 = vadd.f32 %v147, %v199
    %v216 = vadd.f32 %v150, %v200
    %v217 = vadd.f32 %v153, %v201
    %v218 = vadd.f32 %v156, %v202
    %v219 = vadd.f32 %v159, %v203
    %v220 = vadd.f32 %v162, %v204
    %v221 = vtanh.pop %v213
    %v222 = vtanh.pop %v214
    %v223 = vtanh.pop %v215
    %v224 = vtanh.pop %v216
    %v225 = vtanh.pop %v217
    %v226 = vtanh.pop %v218
    %v227 = vtanh.pop %v219
    %v228 = vtanh.pop %v220
    %v229 = vxor.u32 %v213, 2147483648
    %v230 = vxor.u32 %v214, 2147483648
    %v231 = vxor.u32 %v215, 2147483648
    %v232 = vxor.u32 %v216, 2147483648
    %v233 = vxor.u32 %v217, 2147483648
    %v234 = vxor.u32 %v218, 2147483648
    %v235 = vxor.u32 %v219, 2147483648
    %v236 = vxor.u32 %v220, 2147483648
    %v237 = vmul.f32 %v229, 1.442695
    %v238 = vpow.pop %v237
    %v239 = vmul.f32 %v230, 1.442695
    %v240 = vpow.pop %v239
    %v241 = vmul.f32 %v231, 1.442695
    %v242 = vpow.pop %v241
    %v243 = vmul.f32 %v232, 1.442695
    %v244 = vpow.pop %v243
    %v245 = vmul.f32 %v233, 1.442695
    %v246 = vpow.pop %v245
    %v247 = vmul.f32 %v234, 1.442695
    %v248 = vpow.pop %v247
    %v249 = vmul.f32 %v235, 1.442695
    %v250 = vpow.pop %v249
    %v251 = vmul.f32 %v236, 1.442695
    %v252 = vpow.pop %v251
    %v253 = vadd.f32 %v238, 1.0
    %v254 = vadd.f32 %v240, 1.0
    %v255 = vadd.f32 %v242, 1.0
    %v256 = vadd.f32 %v244, 1.0
    %v257 = vadd.f32 %v246, 1.0
    %v258 = vadd.f32 %v248, 1.0
    %v259 = vadd.f32 %v250, 1.0
    %v260 = vadd.f32 %v252, 1.0
    %v261 = vrcp.pop %v253
    %v262 = vmul.f32 %v253, %v261
    %v263 = vsub.f32 1.0, %v262
    %v264 = vmul.f32 %v261, %v263
    %v265 = vadd.f32 %v261, %v264
    %vm266 = vweird.f32 %v253
    %vm267 = vweird.f32 %v261
    %vm268 = vmor %vm266, %vm267
    %v269 = vsel %vm268, %v261, %v265
    %v270 = vand.u32 2147483647, %v253
    %vm271 = vcmp.eq.f32.partialorder %v270, 8.507059e+37
    %v272 = vand.u32 %v253, 2147483648
    %v273 = vor.u32 1.1754944e-38, %v272
    %v274 = vsel %vm271, %v273, %v269
    %v275 = vmul.f32 1.0, %v274
    %v276 = vrcp.pop %v254
    %v277 = vmul.f32 %v254, %v276
    %v278 = vsub.f32 1.0, %v277
    %v279 = vmul.f32 %v276, %v278
    %v280 = vadd.f32 %v276, %v279
    %vm281 = vweird.f32 %v254
    %vm282 = vweird.f32 %v276
    %vm283 = vmor %vm281, %vm282
    %v284 = vsel %vm283, %v276, %v280
    %v285 = vand.u32 2147483647, %v254
    %vm286 = vcmp.eq.f32.partialorder %v285, 8.507059e+37
    %v287 = vand.u32 %v254, 2147483648
    %v288 = vor.u32 1.1754944e-38, %v287
    %v289 = vsel %vm286, %v288, %v284
    %v290 = vmul.f32 1.0, %v289
    %v291 = vrcp.pop %v255
    %v292 = vmul.f32 %v255, %v291
    %v293 = vsub.f32 1.0, %v292
    %v294 = vmul.f32 %v291, %v293
    %v295 = vadd.f32 %v291, %v294
    %vm296 = vweird.f32 %v255
    %vm297 = vweird.f32 %v291
    %vm298 = vmor %vm296, %vm297
    %v299 = vsel %vm298, %v291, %v295
    %v300 = vand.u32 2147483647, %v255
    %vm301 = vcmp.eq.f32.partialorder %v300, 8.507059e+37
    %v302 = vand.u32 %v255, 2147483648
    %v303 = vor.u32 1.1754944e-38, %v302
    %v304 = vsel %vm301, %v303, %v299
    %v305 = vmul.f32 1.0, %v304
    %v306 = vrcp.pop %v256
    %v307 = vmul.f32 %v256, %v306
    %v308 = vsub.f32 1.0, %v307
    %v309 = vmul.f32 %v306, %v308
    %v310 = vadd.f32 %v306, %v309
    %vm311 = vweird.f32 %v256
    %vm312 = vweird.f32 %v306
    %vm313 = vmor %vm311, %vm312
    %v314 = vsel %vm313, %v306, %v310
    %v315 = vand.u32 2147483647, %v256
    %vm316 = vcmp.eq.f32.partialorder %v315, 8.507059e+37
    %v317 = vand.u32 %v256, 2147483648
    %v318 = vor.u32 1.1754944e-38, %v317
    %v319 = vsel %vm316, %v318, %v314
    %v320 = vmul.f32 1.0, %v319
    %v321 = vrcp.pop %v257
    %v322 = vmul.f32 %v257, %v321
    %v323 = vsub.f32 1.0, %v322
    %v324 = vmul.f32 %v321, %v323
    %v325 = vadd.f32 %v321, %v324
    %vm326 = vweird.f32 %v257
    %vm327 = vweird.f32 %v321
    %vm328 = vmor %vm326, %vm327
    %v329 = vsel %vm328, %v321, %v325
    %v330 = vand.u32 2147483647, %v257
    %vm331 = vcmp.eq.f32.partialorder %v330, 8.507059e+37
    %v332 = vand.u32 %v257, 2147483648
    %v333 = vor.u32 1.1754944e-38, %v332
    %v334 = vsel %vm331, %v333, %v329
    %v335 = vmul.f32 1.0, %v334
    %v336 = vrcp.pop %v258
    %v337 = vmul.f32 %v258, %v336
    %v338 = vsub.f32 1.0, %v337
    %v339 = vmul.f32 %v336, %v338
    %v340 = vadd.f32 %v336, %v339
    %vm341 = vweird.f32 %v258
    %vm342 = vweird.f32 %v336
    %vm343 = vmor %vm341, %vm342
    %v344 = vsel %vm343, %v336, %v340
    %v345 = vand.u32 2147483647, %v258
    %vm346 = vcmp.eq.f32.partialorder %v345, 8.507059e+37
    %v347 = vand.u32 %v258, 2147483648
    %v348 = vor.u32 1.1754944e-38, %v347
    %v349 = vsel %vm346, %v348, %v344
    %v350 = vmul.f32 1.0, %v349
    %v351 = vrcp.pop %v259
    %v352 = vmul.f32 %v259, %v351
    %v353 = vsub.f32 1.0, %v352
    %v354 = vmul.f32 %v351, %v353
    %v355 = vadd.f32 %v351, %v354
    %vm356 = vweird.f32 %v259
    %vm357 = vweird.f32 %v351
    %vm358 = vmor %vm356, %vm357
    %v359 = vsel %vm358, %v351, %v355
    %v360 = vand.u32 2147483647, %v259
    %vm361 = vcmp.eq.f32.partialorder %v360, 8.507059e+37
    %v362 = vand.u32 %v259, 2147483648
    %v363 = vor.u32 1.1754944e-38, %v362
    %v364 = vsel %vm361, %v363, %v359
    %v365 = vmul.f32 1.0, %v364
    %v366 = vrcp.pop %v260
    %v367 = vmul.f32 %v260, %v366
    %v368 = vsub.f32 1.0, %v367
    %v369 = vmul.f32 %v366, %v368
    %v370 = vadd.f32 %v366, %v369
    %vm371 = vweird.f32 %v260
    %vm372 = vweird.f32 %v366
    %vm373 = vmor %vm371, %vm372
    %v374 = vsel %vm373, %v366, %v370
    %v375 = vand.u32 2147483647, %v260
    %vm376 = vcmp.eq.f32.partialorder %v375, 8.507059e+37
    %v377 = vand.u32 %v260, 2147483648
    %v378 = vor.u32 1.1754944e-38, %v377
    %v379 = vsel %vm376, %v378, %v374
    %v380 = vmul.f32 1.0, %v379
    %v389 = vrot.slane %v222, 7
    %vm390 = vcmask 1041409
    %v391 = vsel %vm390, %v389, %v221
    %v392 = vrot.slane %v223, 6
    %vm393 = vcmask 1042434
    %v394 = vsel %vm393, %v392, %v391
    %v395 = vrot.slane %v224, 5
    %vm396 = vcmask 1043459
    %v397 = vsel %vm396, %v395, %v394
    %v398 = vrot.slane %v225, 4
    %vm399 = vcmask 1044484
    %v400 = vsel %vm399, %v398, %v397
    %v401 = vrot.slane %v226, 3
    %vm402 = vcmask 1045509
    %v403 = vsel %vm402, %v401, %v400
    %v404 = vrot.slane %v227, 2
    %vm405 = vcmask 1046534
    %v406 = vsel %vm405, %v404, %v403
    %v407 = vrot.slane %v228, 1
    %vm408 = vcmask 1047559
    %v409 = vsel %vm408, %v407, %v406
    %v419 = vrot.slane %v290, 7
    %v420 = vsel %vm390, %v419, %v275
    %v421 = vrot.slane %v305, 6
    %v422 = vsel %vm393, %v421, %v420
    %v423 = vrot.slane %v320, 5
    %v424 = vsel %vm396, %v423, %v422
    %v425 = vrot.slane %v335, 4
    %v426 = vsel %vm399, %v425, %v424
    %v427 = vrot.slane %v350, 3
    %v428 = vsel %vm402, %v427, %v426
    %v429 = vrot.slane %v365, 2
    %v430 = vsel %vm405, %v429, %v428
    %v431 = vrot.slane %v380, 1
    %v432 = vsel %vm408, %v431, %v430
    %v434 = vsel %vm172, %v409, %v432
    %v435 = vmul.f32 %v434, 0.0
    %437 = vrot.lane.b32.xlu0 %v434, 64
    %v438 = vpop.permute.xlu0 %437
    %v440 = vmul.f32 %v434, %v438
    %442 = vrot.lane.b32.xlu0 %v440, 32
    %v443 = vpop.permute.xlu0 %442
    %v445 = vadd.f32 %v435, %v443
    %v446 = vtanh.pop %v445
    %448 = vrot.lane.b32.xlu0 %v446, 64
    %v449 = vpop.permute.xlu0 %448
    %v451 = vmul.f32 %v434, %v449
    %453 = vrot.lane.b32.xlu0 %v451, 32
    %v454 = vpop.permute.xlu0 %453
    %v455 = vsel %vm173, %v454, 0
    %457 = vmatpush.msra.mxu0 0.0
    %458 = vmatpush.msra.mxu0 0.0
    %459 = vmatpush.msra.mxu0 0.0
    %460 = vmatpush.msra.mxu0 0.0
    %461 = vmatpush.msra.mxu0 0.0
    %462 = vmatpush.msra.mxu0 0.0
    %463 = vmatpush.msra.mxu0 0.0
    %464 = vmatpush.msra.mxu0 0.0
    %465 = vmatpush.msra.mxu0 0.0
    %466 = vmatpush.msra.mxu0 0.0
    %467 = vmatpush.msra.mxu0 0.0
    %468 = vmatpush.msra.mxu0 0.0
    %469 = vmatpush.msra.mxu0 %v167
    %470 = vmatpush.msra.mxu0 %v166
    %471 = vmatpush.msra.mxu0 %v165
    %472 = vmatpush.msra.mxu0 %v164
    %473 = vmatmul.f32.gmra.mxu0 %v455
    %v474 = vpop.f32.mrf.mxu0
    %v475 = vadd.f32 0.0, %v474
    %476 = vdwg.mxu0
    %v478 = vrot.slane %v475, 7
    %v479 = vrot.slane %v475, 1
    %v480 = vrot.slane %v475, 2
    %v481 = vrot.slane %v475, 3
    %v482 = vrot.slane %v475, 4
    %v483 = vrot.slane %v475, 5
    %v484 = vrot.slane %v475, 6
    %v493 = vadd.f32 %v141, %v478
    %v494 = vadd.f32 %v144, %v475
    %v495 = vadd.f32 %v147, %v479
    %v496 = vadd.f32 %v150, %v480
    %v497 = vadd.f32 %v153, %v481
    %v498 = vadd.f32 %v156, %v482
    %v499 = vadd.f32 %v159, %v483
    %v500 = vadd.f32 %v162, %v484
    %v501 = vtanh.pop %v493
    %v502 = vtanh.pop %v494
    %v503 = vtanh.pop %v495
    %v504 = vtanh.pop %v496
    %v505 = vtanh.pop %v497
    %v506 = vtanh.pop %v498
    %v507 = vtanh.pop %v499
    %v508 = vtanh.pop %v500
    %v509 = vxor.u32 %v493, 2147483648
    %v510 = vxor.u32 %v494, 2147483648
    %v511 = vxor.u32 %v495, 2147483648
    %v512 = vxor.u32 %v496, 2147483648
    %v513 = vxor.u32 %v497, 2147483648
    %v514 = vxor.u32 %v498, 2147483648
    %v515 = vxor.u32 %v499, 2147483648
    %v516 = vxor.u32 %v500, 2147483648
    %v517 = vmul.f32 %v509, 1.442695
    %v518 = vpow.pop %v517
    %v519 = vmul.f32 %v510, 1.442695
    %v520 = vpow.pop %v519
    %v521 = vmul.f32 %v511, 1.442695
    %v522 = vpow.pop %v521
    %v523 = vmul.f32 %v512, 1.442695
    %v524 = vpow.pop %v523
    %v525 = vmul.f32 %v513, 1.442695
    %v526 = vpow.pop %v525
    %v527 = vmul.f32 %v514, 1.442695
    %v528 = vpow.pop %v527
    %v529 = vmul.f32 %v515, 1.442695
    %v530 = vpow.pop %v529
    %v531 = vmul.f32 %v516, 1.442695
    %v532 = vpow.pop %v531
    %v533 = vadd.f32 %v518, 1.0
    %v534 = vadd.f32 %v520, 1.0
    %v535 = vadd.f32 %v522, 1.0
    %v536 = vadd.f32 %v524, 1.0
    %v537 = vadd.f32 %v526, 1.0
    %v538 = vadd.f32 %v528, 1.0
    %v539 = vadd.f32 %v530, 1.0
    %v540 = vadd.f32 %v532, 1.0
    %v541 = vrcp.pop %v533
    %v542 = vmul.f32 %v533, %v541
    %v543 = vsub.f32 1.0, %v542
    %v544 = vmul.f32 %v541, %v543
    %v545 = vadd.f32 %v541, %v544
    %vm546 = vweird.f32 %v533
    %vm547 = vweird.f32 %v541
    %vm548 = vmor %vm546, %vm547
    %v549 = vsel %vm548, %v541, %v545
    %v550 = vand.u32 2147483647, %v533
    %vm551 = vcmp.eq.f32.partialorder %v550, 8.507059e+37
    %v552 = vand.u32 %v533, 2147483648
    %v553 = vor.u32 1.1754944e-38, %v552
    %v554 = vsel %vm551, %v553, %v549
    %v555 = vmul.f32 1.0, %v554
    %v556 = vrcp.pop %v534
    %v557 = vmul.f32 %v534, %v556
    %v558 = vsub.f32 1.0, %v557
    %v559 = vmul.f32 %v556, %v558
    %v560 = vadd.f32 %v556, %v559
    %vm561 = vweird.f32 %v534
    %vm562 = vweird.f32 %v556
    %vm563 = vmor %vm561, %vm562
    %v564 = vsel %vm563, %v556, %v560
    %v565 = vand.u32 2147483647, %v534
    %vm566 = vcmp.eq.f32.partialorder %v565, 8.507059e+37
    %v567 = vand.u32 %v534, 2147483648
    %v568 = vor.u32 1.1754944e-38, %v567
    %v569 = vsel %vm566, %v568, %v564
    %v570 = vmul.f32 1.0, %v569
    %v571 = vrcp.pop %v535
    %v572 = vmul.f32 %v535, %v571
    %v573 = vsub.f32 1.0, %v572
    %v574 = vmul.f32 %v571, %v573
    %v575 = vadd.f32 %v571, %v574
    %vm576 = vweird.f32 %v535
    %vm577 = vweird.f32 %v571
    %vm578 = vmor %vm576, %vm577
    %v579 = vsel %vm578, %v571, %v575
    %v580 = vand.u32 2147483647, %v535
    %vm581 = vcmp.eq.f32.partialorder %v580, 8.507059e+37
    %v582 = vand.u32 %v535, 2147483648
    %v583 = vor.u32 1.1754944e-38, %v582
    %v584 = vsel %vm581, %v583, %v579
    %v585 = vmul.f32 1.0, %v584
    %v586 = vrcp.pop %v536
    %v587 = vmul.f32 %v536, %v586
    %v588 = vsub.f32 1.0, %v587
    %v589 = vmul.f32 %v586, %v588
    %v590 = vadd.f32 %v586, %v589
    %vm591 = vweird.f32 %v536
    %vm592 = vweird.f32 %v586
    %vm593 = vmor %vm591, %vm592
    %v594 = vsel %vm593, %v586, %v590
    %v595 = vand.u32 2147483647, %v536
    %vm596 = vcmp.eq.f32.partialorder %v595, 8.507059e+37
    %v597 = vand.u32 %v536, 2147483648
    %v598 = vor.u32 1.1754944e-38, %v597
    %v599 = vsel %vm596, %v598, %v594
    %v600 = vmul.f32 1.0, %v599
    %v601 = vrcp.pop %v537
    %v602 = vmul.f32 %v537, %v601
    %v603 = vsub.f32 1.0, %v602
    %v604 = vmul.f32 %v601, %v603
    %v605 = vadd.f32 %v601, %v604
    %vm606 = vweird.f32 %v537
    %vm607 = vweird.f32 %v601
    %vm608 = vmor %vm606, %vm607
    %v609 = vsel %vm608, %v601, %v605
    %v610 = vand.u32 2147483647, %v537
    %vm611 = vcmp.eq.f32.partialorder %v610, 8.507059e+37
    %v612 = vand.u32 %v537, 2147483648
    %v613 = vor.u32 1.1754944e-38, %v612
    %v614 = vsel %vm611, %v613, %v609
    %v615 = vmul.f32 1.0, %v614
    %v616 = vrcp.pop %v538
    %v617 = vmul.f32 %v538, %v616
    %v618 = vsub.f32 1.0, %v617
    %v619 = vmul.f32 %v616, %v618
    %v620 = vadd.f32 %v616, %v619
    %vm621 = vweird.f32 %v538
    %vm622 = vweird.f32 %v616
    %vm623 = vmor %vm621, %vm622
    %v624 = vsel %vm623, %v616, %v620
    %v625 = vand.u32 2147483647, %v538
    %vm626 = vcmp.eq.f32.partialorder %v625, 8.507059e+37
    %v627 = vand.u32 %v538, 2147483648
    %v628 = vor.u32 1.1754944e-38, %v627
    %v629 = vsel %vm626, %v628, %v624
    %v630 = vmul.f32 1.0, %v629
    %v631 = vrcp.pop %v539
    %v632 = vmul.f32 %v539, %v631
    %v633 = vsub.f32 1.0, %v632
    %v634 = vmul.f32 %v631, %v633
    %v635 = vadd.f32 %v631, %v634
    %vm636 = vweird.f32 %v539
    %vm637 = vweird.f32 %v631
    %vm638 = vmor %vm636, %vm637
    %v639 = vsel %vm638, %v631, %v635
    %v640 = vand.u32 2147483647, %v539
    %vm641 = vcmp.eq.f32.partialorder %v640, 8.507059e+37
    %v642 = vand.u32 %v539, 2147483648
    %v643 = vor.u32 1.1754944e-38, %v642
    %v644 = vsel %vm641, %v643, %v639
    %v645 = vmul.f32 1.0, %v644
    %v646 = vrcp.pop %v540
    %v647 = vmul.f32 %v540, %v646
    %v648 = vsub.f32 1.0, %v647
    %v649 = vmul.f32 %v646, %v648
    %v650 = vadd.f32 %v646, %v649
    %vm651 = vweird.f32 %v540
    %vm652 = vweird.f32 %v646
    %vm653 = vmor %vm651, %vm652
    %v654 = vsel %vm653, %v646, %v650
    %v655 = vand.u32 2147483647, %v540
    %vm656 = vcmp.eq.f32.partialorder %v655, 8.507059e+37
    %v657 = vand.u32 %v540, 2147483648
    %v658 = vor.u32 1.1754944e-38, %v657
    %v659 = vsel %vm656, %v658, %v654
    %v660 = vmul.f32 1.0, %v659
    %v669 = vrot.slane %v501, 1
    %v670 = vsel %vm390, %v502, %v669
    %v671 = vrot.slane %v503, 7
    %v672 = vsel %vm393, %v671, %v670
    %v673 = vrot.slane %v504, 6
    %v674 = vsel %vm396, %v673, %v672
    %v675 = vrot.slane %v505, 5
    %v676 = vsel %vm399, %v675, %v674
    %v677 = vrot.slane %v506, 4
    %v678 = vsel %vm402, %v677, %v676
    %v679 = vrot.slane %v507, 3
    %v680 = vsel %vm405, %v679, %v678
    %v681 = vrot.slane %v508, 2
    %v682 = vsel %vm408, %v681, %v680
    %v692 = vrot.slane %v555, 1
    %v693 = vsel %vm390, %v570, %v692
    %v694 = vrot.slane %v585, 7
    %v695 = vsel %vm393, %v694, %v693
    %v696 = vrot.slane %v600, 6
    %v697 = vsel %vm396, %v696, %v695
    %v698 = vrot.slane %v615, 5
    %v699 = vsel %vm399, %v698, %v697
    %v700 = vrot.slane %v630, 4
    %v701 = vsel %vm402, %v700, %v699
    %v702 = vrot.slane %v645, 3
    %v703 = vsel %vm405, %v702, %v701
    %v704 = vrot.slane %v660, 2
    %v705 = vsel %vm408, %v704, %v703
    %v707 = vsel %vm172, %v682, %v705
    %v708 = vmul.f32 %v707, %v445
    %710 = vrot.lane.b32.xlu0 %v707, 64
    %v711 = vpop.permute.xlu0 %710
    %v713 = vmul.f32 %v707, %v711
    %715 = vrot.lane.b32.xlu0 %v713, 32
    %v716 = vpop.permute.xlu0 %715
    %v718 = vadd.f32 %v708, %v716
    %v719 = vtanh.pop %v718
    %721 = vrot.lane.b32.xlu0 %v719, 64
    %v722 = vpop.permute.xlu0 %721
    %v724 = vmul.f32 %v707, %v722
    %726 = vrot.lane.b32.xlu0 %v724, 32
    %v727 = vpop.permute.xlu0 %726
    %v728 = vsel %vm173, %v727, 0
    %730 = vmatpush.msra.mxu0 0.0
    %731 = vmatpush.msra.mxu0 0.0
    %732 = vmatpush.msra.mxu0 0.0
    %733 = vmatpush.msra.mxu0 0.0
    %734 = vmatpush.msra.mxu0 0.0
    %735 = vmatpush.msra.mxu0 0.0
    %736 = vmatpush.msra.mxu0 0.0
    %737 = vmatpush.msra.mxu0 0.0
    %738 = vmatpush.msra.mxu0 0.0
    %739 = vmatpush.msra.mxu0 0.0
    %740 = vmatpush.msra.mxu0 0.0
    %741 = vmatpush.msra.mxu0 0.0
    %742 = vmatpush.msra.mxu0 %v167
    %743 = vmatpush.msra.mxu0 %v166
    %744 = vmatpush.msra.mxu0 %v165
    %745 = vmatpush.msra.mxu0 %v164
    %746 = vmatmul.f32.gmra.mxu0 %v728
    %v747 = vpop.f32.mrf.mxu0
    %v748 = vadd.f32 0.0, %v747
    %749 = vdwg.mxu0
    %v751 = vrot.slane %v748, 6
    %v752 = vrot.slane %v748, 7
    %v753 = vrot.slane %v748, 1
    %v754 = vrot.slane %v748, 2
    %v755 = vrot.slane %v748, 3
    %v756 = vrot.slane %v748, 4
    %v757 = vrot.slane %v748, 5
    %v766 = vadd.f32 %v141, %v751
    %v767 = vadd.f32 %v144, %v752
    %v768 = vadd.f32 %v147, %v748
    %v769 = vadd.f32 %v150, %v753
    %v770 = vadd.f32 %v153, %v754
    %v771 = vadd.f32 %v156, %v755
    %v772 = vadd.f32 %v159, %v756
    %v773 = vadd.f32 %v162, %v757
    %v774 = vtanh.pop %v766
    %v775 = vtanh.pop %v767
    %v776 = vtanh.pop %v768
    %v777 = vtanh.pop %v769
    %v778 = vtanh.pop %v770
    %v779 = vtanh.pop %v771
    %v780 = vtanh.pop %v772
    %v781 = vtanh.pop %v773
    %v782 = vxor.u32 %v766, 2147483648
    %v783 = vxor.u32 %v767, 2147483648
    %v784 = vxor.u32 %v768, 2147483648
    %v785 = vxor.u32 %v769, 2147483648
    %v786 = vxor.u32 %v770, 2147483648
    %v787 = vxor.u32 %v771, 2147483648
    %v788 = vxor.u32 %v772, 2147483648
    %v789 = vxor.u32 %v773, 2147483648
    %v790 = vmul.f32 %v782, 1.442695
    %v791 = vpow.pop %v790
    %v792 = vmul.f32 %v783, 1.442695
    %v793 = vpow.pop %v792
    %v794 = vmul.f32 %v784, 1.442695
    %v795 = vpow.pop %v794
    %v796 = vmul.f32 %v785, 1.442695
    %v797 = vpow.pop %v796
    %v798 = vmul.f32 %v786, 1.442695
    %v799 = vpow.pop %v798
    %v800 = vmul.f32 %v787, 1.442695
    %v801 = vpow.pop %v800
    %v802 = vmul.f32 %v788, 1.442695
    %v803 = vpow.pop %v802
    %v804 = vmul.f32 %v789, 1.442695
    %v805 = vpow.pop %v804
    %v806 = vadd.f32 %v791, 1.0
    %v807 = vadd.f32 %v793, 1.0
    %v808 = vadd.f32 %v795, 1.0
    %v809 = vadd.f32 %v797, 1.0
    %v810 = vadd.f32 %v799, 1.0
    %v811 = vadd.f32 %v801, 1.0
    %v812 = vadd.f32 %v803, 1.0
    %v813 = vadd.f32 %v805, 1.0
    %v814 = vrcp.pop %v806
    %v815 = vmul.f32 %v806, %v814
    %v816 = vsub.f32 1.0, %v815
    %v817 = vmul.f32 %v814, %v816
    %v818 = vadd.f32 %v814, %v817
    %vm819 = vweird.f32 %v806
    %vm820 = vweird.f32 %v814
    %vm821 = vmor %vm819, %vm820
    %v822 = vsel %vm821, %v814, %v818
    %v823 = vand.u32 2147483647, %v806
    %vm824 = vcmp.eq.f32.partialorder %v823, 8.507059e+37
    %v825 = vand.u32 %v806, 2147483648
    %v826 = vor.u32 1.1754944e-38, %v825
    %v827 = vsel %vm824, %v826, %v822
    %v828 = vmul.f32 1.0, %v827
    %v829 = vrcp.pop %v807
    %v830 = vmul.f32 %v807, %v829
    %v831 = vsub.f32 1.0, %v830
    %v832 = vmul.f32 %v829, %v831
    %v833 = vadd.f32 %v829, %v832
    %vm834 = vweird.f32 %v807
    %vm835 = vweird.f32 %v829
    %vm836 = vmor %vm834, %vm835
    %v837 = vsel %vm836, %v829, %v833
    %v838 = vand.u32 2147483647, %v807
    %vm839 = vcmp.eq.f32.partialorder %v838, 8.507059e+37
    %v840 = vand.u32 %v807, 2147483648
    %v841 = vor.u32 1.1754944e-38, %v840
    %v842 = vsel %vm839, %v841, %v837
    %v843 = vmul.f32 1.0, %v842
    %v844 = vrcp.pop %v808
    %v845 = vmul.f32 %v808, %v844
    %v846 = vsub.f32 1.0, %v845
    %v847 = vmul.f32 %v844, %v846
    %v848 = vadd.f32 %v844, %v847
    %vm849 = vweird.f32 %v808
    %vm850 = vweird.f32 %v844
    %vm851 = vmor %vm849, %vm850
    %v852 = vsel %vm851, %v844, %v848
    %v853 = vand.u32 2147483647, %v808
    %vm854 = vcmp.eq.f32.partialorder %v853, 8.507059e+37
    %v855 = vand.u32 %v808, 2147483648
    %v856 = vor.u32 1.1754944e-38, %v855
    %v857 = vsel %vm854, %v856, %v852
    %v858 = vmul.f32 1.0, %v857
    %v859 = vrcp.pop %v809
    %v860 = vmul.f32 %v809, %v859
    %v861 = vsub.f32 1.0, %v860
    %v862 = vmul.f32 %v859, %v861
    %v863 = vadd.f32 %v859, %v862
    %vm864 = vweird.f32 %v809
    %vm865 = vweird.f32 %v859
    %vm866 = vmor %vm864, %vm865
    %v867 = vsel %vm866, %v859, %v863
    %v868 = vand.u32 2147483647, %v809
    %vm869 = vcmp.eq.f32.partialorder %v868, 8.507059e+37
    %v870 = vand.u32 %v809, 2147483648
    %v871 = vor.u32 1.1754944e-38, %v870
    %v872 = vsel %vm869, %v871, %v867
    %v873 = vmul.f32 1.0, %v872
    %v874 = vrcp.pop %v810
    %v875 = vmul.f32 %v810, %v874
    %v876 = vsub.f32 1.0, %v875
    %v877 = vmul.f32 %v874, %v876
    %v878 = vadd.f32 %v874, %v877
    %vm879 = vweird.f32 %v810
    %vm880 = vweird.f32 %v874
    %vm881 = vmor %vm879, %vm880
    %v882 = vsel %vm881, %v874, %v878
    %v883 = vand.u32 2147483647, %v810
    %vm884 = vcmp.eq.f32.partialorder %v883, 8.507059e+37
    %v885 = vand.u32 %v810, 2147483648
    %v886 = vor.u32 1.1754944e-38, %v885
    %v887 = vsel %vm884, %v886, %v882
    %v888 = vmul.f32 1.0, %v887
    %v889 = vrcp.pop %v811
    %v890 = vmul.f32 %v811, %v889
    %v891 = vsub.f32 1.0, %v890
    %v892 = vmul.f32 %v889, %v891
    %v893 = vadd.f32 %v889, %v892
    %vm894 = vweird.f32 %v811
    %vm895 = vweird.f32 %v889
    %vm896 = vmor %vm894, %vm895
    %v897 = vsel %vm896, %v889, %v893
    %v898 = vand.u32 2147483647, %v811
    %vm899 = vcmp.eq.f32.partialorder %v898, 8.507059e+37
    %v900 = vand.u32 %v811, 2147483648
    %v901 = vor.u32 1.1754944e-38, %v900
    %v902 = vsel %vm899, %v901, %v897
    %v903 = vmul.f32 1.0, %v902
    %v904 = vrcp.pop %v812
    %v905 = vmul.f32 %v812, %v904
    %v906 = vsub.f32 1.0, %v905
    %v907 = vmul.f32 %v904, %v906
    %v908 = vadd.f32 %v904, %v907
    %vm909 = vweird.f32 %v812
    %vm910 = vweird.f32 %v904
    %vm911 = vmor %vm909, %vm910
    %v912 = vsel %vm911, %v904, %v908
    %v913 = vand.u32 2147483647, %v812
    %vm914 = vcmp.eq.f32.partialorder %v913, 8.507059e+37
    %v915 = vand.u32 %v812, 2147483648
    %v916 = vor.u32 1.1754944e-38, %v915
    %v917 = vsel %vm914, %v916, %v912
    %v918 = vmul.f32 1.0, %v917
    %v919 = vrcp.pop %v813
    %v920 = vmul.f32 %v813, %v919
    %v921 = vsub.f32 1.0, %v920
    %v922 = vmul.f32 %v919, %v921
    %v923 = vadd.f32 %v919, %v922
    %vm924 = vweird.f32 %v813
    %vm925 = vweird.f32 %v919
    %vm926 = vmor %vm924, %vm925
    %v927 = vsel %vm926, %v919, %v923
    %v928 = vand.u32 2147483647, %v813
    %vm929 = vcmp.eq.f32.partialorder %v928, 8.507059e+37
    %v930 = vand.u32 %v813, 2147483648
    %v931 = vor.u32 1.1754944e-38, %v930
    %v932 = vsel %vm929, %v931, %v927
    %v933 = vmul.f32 1.0, %v932
    %v942 = vrot.slane %v774, 2
    %v943 = vrot.slane %v775, 1
    %v944 = vsel %vm390, %v943, %v942
    %v945 = vsel %vm393, %v776, %v944
    %v946 = vrot.slane %v777, 7
    %v947 = vsel %vm396, %v946, %v945
    %v948 = vrot.slane %v778, 6
    %v949 = vsel %vm399, %v948, %v947
    %v950 = vrot.slane %v779, 5
    %v951 = vsel %vm402, %v950, %v949
    %v952 = vrot.slane %v780, 4
    %v953 = vsel %vm405, %v952, %v951
    %v954 = vrot.slane %v781, 3
    %v955 = vsel %vm408, %v954, %v953
    %v965 = vrot.slane %v828, 2
    %v966 = vrot.slane %v843, 1
    %v967 = vsel %vm390, %v966, %v965
    %v968 = vsel %vm393, %v858, %v967
    %v969 = vrot.slane %v873, 7
    %v970 = vsel %vm396, %v969, %v968
    %v971 = vrot.slane %v888, 6
    %v972 = vsel %vm399, %v971, %v970
    %v973 = vrot.slane %v903, 5
    %v974 = vsel %vm402, %v973, %v972
    %v975 = vrot.slane %v918, 4
    %v976 = vsel %vm405, %v975, %v974
    %v977 = vrot.slane %v933, 3
    %v978 = vsel %vm408, %v977, %v976
    %v980 = vsel %vm172, %v955, %v978
    %v981 = vmul.f32 %v980, %v718
    %983 = vrot.lane.b32.xlu0 %v980, 64
    %v984 = vpop.permute.xlu0 %983
    %v986 = vmul.f32 %v980, %v984
    %988 = vrot.lane.b32.xlu0 %v986, 32
    %v989 = vpop.permute.xlu0 %988
    %v991 = vadd.f32 %v981, %v989
    %v992 = vtanh.pop %v991
    %994 = vrot.lane.b32.xlu0 %v992, 64
    %v995 = vpop.permute.xlu0 %994
    %v997 = vmul.f32 %v980, %v995
    %999 = vrot.lane.b32.xlu0 %v997, 32
    %v1000 = vpop.permute.xlu0 %999
    %v1001 = vsel %vm173, %v1000, 0
    %1003 = vmatpush.msra.mxu0 0.0
    %1004 = vmatpush.msra.mxu0 0.0
    %1005 = vmatpush.msra.mxu0 0.0
    %1006 = vmatpush.msra.mxu0 0.0
    %1007 = vmatpush.msra.mxu0 0.0
    %1008 = vmatpush.msra.mxu0 0.0
    %1009 = vmatpush.msra.mxu0 0.0
    %1010 = vmatpush.msra.mxu0 0.0
    %1011 = vmatpush.msra.mxu0 0.0
    %1012 = vmatpush.msra.mxu0 0.0
    %1013 = vmatpush.msra.mxu0 0.0
    %1014 = vmatpush.msra.mxu0 0.0
    %1015 = vmatpush.msra.mxu0 %v167
    %1016 = vmatpush.msra.mxu0 %v166
    %1017 = vmatpush.msra.mxu0 %v165
    %1018 = vmatpush.msra.mxu0 %v164
    %1019 = vmatmul.f32.gmra.mxu0 %v1001
    %v1020 = vpop.f32.mrf.mxu0
    %v1021 = vadd.f32 0.0, %v1020
    %1022 = vdwg.mxu0
    %v1024 = vrot.slane %v1021, 5
    %v1025 = vrot.slane %v1021, 6
    %v1026 = vrot.slane %v1021, 7
    %v1027 = vrot.slane %v1021, 1
    %v1028 = vrot.slane %v1021, 2
    %v1029 = vrot.slane %v1021, 3
    %v1030 = vrot.slane %v1021, 4
    %v1039 = vadd.f32 %v141, %v1024
    %v1040 = vadd.f32 %v144, %v1025
    %v1041 = vadd.f32 %v147, %v1026
    %v1042 = vadd.f32 %v150, %v1021
    %v1043 = vadd.f32 %v153, %v1027
    %v1044 = vadd.f32 %v156, %v1028
    %v1045 = vadd.f32 %v159, %v1029
    %v1046 = vadd.f32 %v162, %v1030
    %v1047 = vtanh.pop %v1039
    %v1048 = vtanh.pop %v1040
    %v1049 = vtanh.pop %v1041
    %v1050 = vtanh.pop %v1042
    %v1051 = vtanh.pop %v1043
    %v1052 = vtanh.pop %v1044
    %v1053 = vtanh.pop %v1045
    %v1054 = vtanh.pop %v1046
    %v1055 = vxor.u32 %v1039, 2147483648
    %v1056 = vxor.u32 %v1040, 2147483648
    %v1057 = vxor.u32 %v1041, 2147483648
    %v1058 = vxor.u32 %v1042, 2147483648
    %v1059 = vxor.u32 %v1043, 2147483648
    %v1060 = vxor.u32 %v1044, 2147483648
    %v1061 = vxor.u32 %v1045, 2147483648
    %v1062 = vxor.u32 %v1046, 2147483648
    %v1063 = vmul.f32 %v1055, 1.442695
    %v1064 = vpow.pop %v1063
    %v1065 = vmul.f32 %v1056, 1.442695
    %v1066 = vpow.pop %v1065
    %v1067 = vmul.f32 %v1057, 1.442695
    %v1068 = vpow.pop %v1067
    %v1069 = vmul.f32 %v1058, 1.442695
    %v1070 = vpow.pop %v1069
    %v1071 = vmul.f32 %v1059, 1.442695
    %v1072 = vpow.pop %v1071
    %v1073 = vmul.f32 %v1060, 1.442695
    %v1074 = vpow.pop %v1073
    %v1075 = vmul.f32 %v1061, 1.442695
    %v1076 = vpow.pop %v1075
    %v1077 = vmul.f32 %v1062, 1.442695
    %v1078 = vpow.pop %v1077
    %v1079 = vadd.f32 %v1064, 1.0
    %v1080 = vadd.f32 %v1066, 1.0
    %v1081 = vadd.f32 %v1068, 1.0
    %v1082 = vadd.f32 %v1070, 1.0
    %v1083 = vadd.f32 %v1072, 1.0
    %v1084 = vadd.f32 %v1074, 1.0
    %v1085 = vadd.f32 %v1076, 1.0
    %v1086 = vadd.f32 %v1078, 1.0
    %v1087 = vrcp.pop %v1079
    %v1088 = vmul.f32 %v1079, %v1087
    %v1089 = vsub.f32 1.0, %v1088
    %v1090 = vmul.f32 %v1087, %v1089
    %v1091 = vadd.f32 %v1087, %v1090
    %vm1092 = vweird.f32 %v1079
    %vm1093 = vweird.f32 %v1087
    %vm1094 = vmor %vm1092, %vm1093
    %v1095 = vsel %vm1094, %v1087, %v1091
    %v1096 = vand.u32 2147483647, %v1079
    %vm1097 = vcmp.eq.f32.partialorder %v1096, 8.507059e+37
    %v1098 = vand.u32 %v1079, 2147483648
    %v1099 = vor.u32 1.1754944e-38, %v1098
    %v1100 = vsel %vm1097, %v1099, %v1095
    %v1101 = vmul.f32 1.0, %v1100
    %v1102 = vrcp.pop %v1080
    %v1103 = vmul.f32 %v1080, %v1102
    %v1104 = vsub.f32 1.0, %v1103
    %v1105 = vmul.f32 %v1102, %v1104
    %v1106 = vadd.f32 %v1102, %v1105
    %vm1107 = vweird.f32 %v1080
    %vm1108 = vweird.f32 %v1102
    %vm1109 = vmor %vm1107, %vm1108
    %v1110 = vsel %vm1109, %v1102, %v1106
    %v1111 = vand.u32 2147483647, %v1080
    %vm1112 = vcmp.eq.f32.partialorder %v1111, 8.507059e+37
    %v1113 = vand.u32 %v1080, 2147483648
    %v1114 = vor.u32 1.1754944e-38, %v1113
    %v1115 = vsel %vm1112, %v1114, %v1110
    %v1116 = vmul.f32 1.0, %v1115
    %v1117 = vrcp.pop %v1081
    %v1118 = vmul.f32 %v1081, %v1117
    %v1119 = vsub.f32 1.0, %v1118
    %v1120 = vmul.f32 %v1117, %v1119
    %v1121 = vadd.f32 %v1117, %v1120
    %vm1122 = vweird.f32 %v1081
    %vm1123 = vweird.f32 %v1117
    %vm1124 = vmor %vm1122, %vm1123
    %v1125 = vsel %vm1124, %v1117, %v1121
    %v1126 = vand.u32 2147483647, %v1081
    %vm1127 = vcmp.eq.f32.partialorder %v1126, 8.507059e+37
    %v1128 = vand.u32 %v1081, 2147483648
    %v1129 = vor.u32 1.1754944e-38, %v1128
    %v1130 = vsel %vm1127, %v1129, %v1125
    %v1131 = vmul.f32 1.0, %v1130
    %v1132 = vrcp.pop %v1082
    %v1133 = vmul.f32 %v1082, %v1132
    %v1134 = vsub.f32 1.0, %v1133
    %v1135 = vmul.f32 %v1132, %v1134
    %v1136 = vadd.f32 %v1132, %v1135
    %vm1137 = vweird.f32 %v1082
    %vm1138 = vweird.f32 %v1132
    %vm1139 = vmor %vm1137, %vm1138
    %v1140 = vsel %vm1139, %v1132, %v1136
    %v1141 = vand.u32 2147483647, %v1082
    %vm1142 = vcmp.eq.f32.partialorder %v1141, 8.507059e+37
    %v1143 = vand.u32 %v1082, 2147483648
    %v1144 = vor.u32 1.1754944e-38, %v1143
    %v1145 = vsel %vm1142, %v1144, %v1140
    %v1146 = vmul.f32 1.0, %v1145
    %v1147 = vrcp.pop %v1083
    %v1148 = vmul.f32 %v1083, %v1147
    %v1149 = vsub.f32 1.0, %v1148
    %v1150 = vmul.f32 %v1147, %v1149
    %v1151 = vadd.f32 %v1147, %v1150
    %vm1152 = vweird.f32 %v1083
    %vm1153 = vweird.f32 %v1147
    %vm1154 = vmor %vm1152, %vm1153
    %v1155 = vsel %vm1154, %v1147, %v1151
    %v1156 = vand.u32 2147483647, %v1083
    %vm1157 = vcmp.eq.f32.partialorder %v1156, 8.507059e+37
    %v1158 = vand.u32 %v1083, 2147483648
    %v1159 = vor.u32 1.1754944e-38, %v1158
    %v1160 = vsel %vm1157, %v1159, %v1155
    %v1161 = vmul.f32 1.0, %v1160
    %v1162 = vrcp.pop %v1084
    %v1163 = vmul.f32 %v1084, %v1162
    %v1164 = vsub.f32 1.0, %v1163
    %v1165 = vmul.f32 %v1162, %v1164
    %v1166 = vadd.f32 %v1162, %v1165
    %vm1167 = vweird.f32 %v1084
    %vm1168 = vweird.f32 %v1162
    %vm1169 = vmor %vm1167, %vm1168
    %v1170 = vsel %vm1169, %v1162, %v1166
    %v1171 = vand.u32 2147483647, %v1084
    %vm1172 = vcmp.eq.f32.partialorder %v1171, 8.507059e+37
    %v1173 = vand.u32 %v1084, 2147483648
    %v1174 = vor.u32 1.1754944e-38, %v1173
    %v1175 = vsel %vm1172, %v1174, %v1170
    %v1176 = vmul.f32 1.0, %v1175
    %v1177 = vrcp.pop %v1085
    %v1178 = vmul.f32 %v1085, %v1177
    %v1179 = vsub.f32 1.0, %v1178
    %v1180 = vmul.f32 %v1177, %v1179
    %v1181 = vadd.f32 %v1177, %v1180
    %vm1182 = vweird.f32 %v1085
    %vm1183 = vweird.f32 %v1177
    %vm1184 = vmor %vm1182, %vm1183
    %v1185 = vsel %vm1184, %v1177, %v1181
    %v1186 = vand.u32 2147483647, %v1085
    %vm1187 = vcmp.eq.f32.partialorder %v1186, 8.507059e+37
    %v1188 = vand.u32 %v1085, 2147483648
    %v1189 = vor.u32 1.1754944e-38, %v1188
    %v1190 = vsel %vm1187, %v1189, %v1185
    %v1191 = vmul.f32 1.0, %v1190
    %v1192 = vrcp.pop %v1086
    %v1193 = vmul.f32 %v1086, %v1192
    %v1194 = vsub.f32 1.0, %v1193
    %v1195 = vmul.f32 %v1192, %v1194
    %v1196 = vadd.f32 %v1192, %v1195
    %vm1197 = vweird.f32 %v1086
    %vm1198 = vweird.f32 %v1192
    %vm1199 = vmor %vm1197, %vm1198
    %v1200 = vsel %vm1199, %v1192, %v1196
    %v1201 = vand.u32 2147483647, %v1086
    %vm1202 = vcmp.eq.f32.partialorder %v1201, 8.507059e+37
    %v1203 = vand.u32 %v1086, 2147483648
    %v1204 = vor.u32 1.1754944e-38, %v1203
    %v1205 = vsel %vm1202, %v1204, %v1200
    %v1206 = vmul.f32 1.0, %v1205
    %v1215 = vrot.slane %v1047, 3
    %v1216 = vrot.slane %v1048, 2
    %v1217 = vsel %vm390, %v1216, %v1215
    %v1218 = vrot.slane %v1049, 1
    %v1219 = vsel %vm393, %v1218, %v1217
    %v1220 = vsel %vm396, %v1050, %v1219
    %v1221 = vrot.slane %v1051, 7
    %v1222 = vsel %vm399, %v1221, %v1220
    %v1223 = vrot.slane %v1052, 6
    %v1224 = vsel %vm402, %v1223, %v1222
    %v1225 = vrot.slane %v1053, 5
    %v1226 = vsel %vm405, %v1225, %v1224
    %v1227 = vrot.slane %v1054, 4
    %v1228 = vsel %vm408, %v1227, %v1226
    %v1238 = vrot.slane %v1101, 3
    %v1239 = vrot.slane %v1116, 2
    %v1240 = vsel %vm390, %v1239, %v1238
    %v1241 = vrot.slane %v1131, 1
    %v1242 = vsel %vm393, %v1241, %v1240
    %v1243 = vsel %vm396, %v1146, %v1242
    %v1244 = vrot.slane %v1161, 7
    %v1245 = vsel %vm399, %v1244, %v1243
    %v1246 = vrot.slane %v1176, 6
    %v1247 = vsel %vm402, %v1246, %v1245
    %v1248 = vrot.slane %v1191, 5
    %v1249 = vsel %vm405, %v1248, %v1247
    %v1250 = vrot.slane %v1206, 4
    %v1251 = vsel %vm408, %v1250, %v1249
    %v1253 = vsel %vm172, %v1228, %v1251
    %v1254 = vmul.f32 %v1253, %v991
    %1256 = vrot.lane.b32.xlu0 %v1253, 64
    %v1257 = vpop.permute.xlu0 %1256
    %v1259 = vmul.f32 %v1253, %v1257
    %1261 = vrot.lane.b32.xlu0 %v1259, 32
    %v1262 = vpop.permute.xlu0 %1261
    %v1264 = vadd.f32 %v1254, %v1262
    %v1265 = vtanh.pop %v1264
    %1267 = vrot.lane.b32.xlu0 %v1265, 64
    %v1268 = vpop.permute.xlu0 %1267
    %v1270 = vmul.f32 %v1253, %v1268
    %1272 = vrot.lane.b32.xlu0 %v1270, 32
    %v1273 = vpop.permute.xlu0 %1272
    %v1274 = vsel %vm173, %v1273, 0
    %1276 = vmatpush.msra.mxu0 0.0
    %1277 = vmatpush.msra.mxu0 0.0
    %1278 = vmatpush.msra.mxu0 0.0
    %1279 = vmatpush.msra.mxu0 0.0
    %1280 = vmatpush.msra.mxu0 0.0
    %1281 = vmatpush.msra.mxu0 0.0
    %1282 = vmatpush.msra.mxu0 0.0
    %1283 = vmatpush.msra.mxu0 0.0
    %1284 = vmatpush.msra.mxu0 0.0
    %1285 = vmatpush.msra.mxu0 0.0
    %1286 = vmatpush.msra.mxu0 0.0
    %1287 = vmatpush.msra.mxu0 0.0
    %1288 = vmatpush.msra.mxu0 %v167
    %1289 = vmatpush.msra.mxu0 %v166
    %1290 = vmatpush.msra.mxu0 %v165
    %1291 = vmatpush.msra.mxu0 %v164
    %1292 = vmatmul.f32.gmra.mxu0 %v1274
    %v1293 = vpop.f32.mrf.mxu0
    %v1294 = vadd.f32 0.0, %v1293
    %1295 = vdwg.mxu0
    %v1297 = vrot.slane %v1294, 4
    %v1298 = vrot.slane %v1294, 5
    %v1299 = vrot.slane %v1294, 6
    %v1300 = vrot.slane %v1294, 7
    %v1301 = vrot.slane %v1294, 1
    %v1302 = vrot.slane %v1294, 2
    %v1303 = vrot.slane %v1294, 3
    %v1312 = vadd.f32 %v141, %v1297
    %v1313 = vadd.f32 %v144, %v1298
    %v1314 = vadd.f32 %v147, %v1299
    %v1315 = vadd.f32 %v150, %v1300
    %v1316 = vadd.f32 %v153, %v1294
    %v1317 = vadd.f32 %v156, %v1301
    %v1318 = vadd.f32 %v159, %v1302
    %v1319 = vadd.f32 %v162, %v1303
    %v1320 = vtanh.pop %v1312
    %v1321 = vtanh.pop %v1313
    %v1322 = vtanh.pop %v1314
    %v1323 = vtanh.pop %v1315
    %v1324 = vtanh.pop %v1316
    %v1325 = vtanh.pop %v1317
    %v1326 = vtanh.pop %v1318
    %v1327 = vtanh.pop %v1319
    %v1328 = vxor.u32 %v1312, 2147483648
    %v1329 = vxor.u32 %v1313, 2147483648
    %v1330 = vxor.u32 %v1314, 2147483648
    %v1331 = vxor.u32 %v1315, 2147483648
    %v1332 = vxor.u32 %v1316, 2147483648
    %v1333 = vxor.u32 %v1317, 2147483648
    %v1334 = vxor.u32 %v1318, 2147483648
    %v1335 = vxor.u32 %v1319, 2147483648
    %v1336 = vmul.f32 %v1328, 1.442695
    %v1337 = vpow.pop %v1336
    %v1338 = vmul.f32 %v1329, 1.442695
    %v1339 = vpow.pop %v1338
    %v1340 = vmul.f32 %v1330, 1.442695
    %v1341 = vpow.pop %v1340
    %v1342 = vmul.f32 %v1331, 1.442695
    %v1343 = vpow.pop %v1342
    %v1344 = vmul.f32 %v1332, 1.442695
    %v1345 = vpow.pop %v1344
    %v1346 = vmul.f32 %v1333, 1.442695
    %v1347 = vpow.pop %v1346
    %v1348 = vmul.f32 %v1334, 1.442695
    %v1349 = vpow.pop %v1348
    %v1350 = vmul.f32 %v1335, 1.442695
    %v1351 = vpow.pop %v1350
    %v1352 = vadd.f32 %v1337, 1.0
    %v1353 = vadd.f32 %v1339, 1.0
    %v1354 = vadd.f32 %v1341, 1.0
    %v1355 = vadd.f32 %v1343, 1.0
    %v1356 = vadd.f32 %v1345, 1.0
    %v1357 = vadd.f32 %v1347, 1.0
    %v1358 = vadd.f32 %v1349, 1.0
    %v1359 = vadd.f32 %v1351, 1.0
    %v1360 = vrcp.pop %v1352
    %v1361 = vmul.f32 %v1352, %v1360
    %v1362 = vsub.f32 1.0, %v1361
    %v1363 = vmul.f32 %v1360, %v1362
    %v1364 = vadd.f32 %v1360, %v1363
    %vm1365 = vweird.f32 %v1352
    %vm1366 = vweird.f32 %v1360
    %vm1367 = vmor %vm1365, %vm1366
    %v1368 = vsel %vm1367, %v1360, %v1364
    %v1369 = vand.u32 2147483647, %v1352
    %vm1370 = vcmp.eq.f32.partialorder %v1369, 8.507059e+37
    %v1371 = vand.u32 %v1352, 2147483648
    %v1372 = vor.u32 1.1754944e-38, %v1371
    %v1373 = vsel %vm1370, %v1372, %v1368
    %v1374 = vmul.f32 1.0, %v1373
    %v1375 = vrcp.pop %v1353
    %v1376 = vmul.f32 %v1353, %v1375
    %v1377 = vsub.f32 1.0, %v1376
    %v1378 = vmul.f32 %v1375, %v1377
    %v1379 = vadd.f32 %v1375, %v1378
    %vm1380 = vweird.f32 %v1353
    %vm1381 = vweird.f32 %v1375
    %vm1382 = vmor %vm1380, %vm1381
    %v1383 = vsel %vm1382, %v1375, %v1379
    %v1384 = vand.u32 2147483647, %v1353
    %vm1385 = vcmp.eq.f32.partialorder %v1384, 8.507059e+37
    %v1386 = vand.u32 %v1353, 2147483648
    %v1387 = vor.u32 1.1754944e-38, %v1386
    %v1388 = vsel %vm1385, %v1387, %v1383
    %v1389 = vmul.f32 1.0, %v1388
    %v1390 = vrcp.pop %v1354
    %v1391 = vmul.f32 %v1354, %v1390
    %v1392 = vsub.f32 1.0, %v1391
    %v1393 = vmul.f32 %v1390, %v1392
    %v1394 = vadd.f32 %v1390, %v1393
    %vm1395 = vweird.f32 %v1354
    %vm1396 = vweird.f32 %v1390
    %vm1397 = vmor %vm1395, %vm1396
    %v1398 = vsel %vm1397, %v1390, %v1394
    %v1399 = vand.u32 2147483647, %v1354
    %vm1400 = vcmp.eq.f32.partialorder %v1399, 8.507059e+37
    %v1401 = vand.u32 %v1354, 2147483648
    %v1402 = vor.u32 1.1754944e-38, %v1401
    %v1403 = vsel %vm1400, %v1402, %v1398
    %v1404 = vmul.f32 1.0, %v1403
    %v1405 = vrcp.pop %v1355
    %v1406 = vmul.f32 %v1355, %v1405
    %v1407 = vsub.f32 1.0, %v1406
    %v1408 = vmul.f32 %v1405, %v1407
    %v1409 = vadd.f32 %v1405, %v1408
    %vm1410 = vweird.f32 %v1355
    %vm1411 = vweird.f32 %v1405
    %vm1412 = vmor %vm1410, %vm1411
    %v1413 = vsel %vm1412, %v1405, %v1409
    %v1414 = vand.u32 2147483647, %v1355
    %vm1415 = vcmp.eq.f32.partialorder %v1414, 8.507059e+37
    %v1416 = vand.u32 %v1355, 2147483648
    %v1417 = vor.u32 1.1754944e-38, %v1416
    %v1418 = vsel %vm1415, %v1417, %v1413
    %v1419 = vmul.f32 1.0, %v1418
    %v1420 = vrcp.pop %v1356
    %v1421 = vmul.f32 %v1356, %v1420
    %v1422 = vsub.f32 1.0, %v1421
    %v1423 = vmul.f32 %v1420, %v1422
    %v1424 = vadd.f32 %v1420, %v1423
    %vm1425 = vweird.f32 %v1356
    %vm1426 = vweird.f32 %v1420
    %vm1427 = vmor %vm1425, %vm1426
    %v1428 = vsel %vm1427, %v1420, %v1424
    %v1429 = vand.u32 2147483647, %v1356
    %vm1430 = vcmp.eq.f32.partialorder %v1429, 8.507059e+37
    %v1431 = vand.u32 %v1356, 2147483648
    %v1432 = vor.u32 1.1754944e-38, %v1431
    %v1433 = vsel %vm1430, %v1432, %v1428
    %v1434 = vmul.f32 1.0, %v1433
    %v1435 = vrcp.pop %v1357
    %v1436 = vmul.f32 %v1357, %v1435
    %v1437 = vsub.f32 1.0, %v1436
    %v1438 = vmul.f32 %v1435, %v1437
    %v1439 = vadd.f32 %v1435, %v1438
    %vm1440 = vweird.f32 %v1357
    %vm1441 = vweird.f32 %v1435
    %vm1442 = vmor %vm1440, %vm1441
    %v1443 = vsel %vm1442, %v1435, %v1439
    %v1444 = vand.u32 2147483647, %v1357
    %vm1445 = vcmp.eq.f32.partialorder %v1444, 8.507059e+37
    %v1446 = vand.u32 %v1357, 2147483648
    %v1447 = vor.u32 1.1754944e-38, %v1446
    %v1448 = vsel %vm1445, %v1447, %v1443
    %v1449 = vmul.f32 1.0, %v1448
    %v1450 = vrcp.pop %v1358
    %v1451 = vmul.f32 %v1358, %v1450
    %v1452 = vsub.f32 1.0, %v1451
    %v1453 = vmul.f32 %v1450, %v1452
    %v1454 = vadd.f32 %v1450, %v1453
    %vm1455 = vweird.f32 %v1358
    %vm1456 = vweird.f32 %v1450
    %vm1457 = vmor %vm1455, %vm1456
    %v1458 = vsel %vm1457, %v1450, %v1454
    %v1459 = vand.u32 2147483647, %v1358
    %vm1460 = vcmp.eq.f32.partialorder %v1459, 8.507059e+37
    %v1461 = vand.u32 %v1358, 2147483648
    %v1462 = vor.u32 1.1754944e-38, %v1461
    %v1463 = vsel %vm1460, %v1462, %v1458
    %v1464 = vmul.f32 1.0, %v1463
    %v1465 = vrcp.pop %v1359
    %v1466 = vmul.f32 %v1359, %v1465
    %v1467 = vsub.f32 1.0, %v1466
    %v1468 = vmul.f32 %v1465, %v1467
    %v1469 = vadd.f32 %v1465, %v1468
    %vm1470 = vweird.f32 %v1359
    %vm1471 = vweird.f32 %v1465
    %vm1472 = vmor %vm1470, %vm1471
    %v1473 = vsel %vm1472, %v1465, %v1469
    %v1474 = vand.u32 2147483647, %v1359
    %vm1475 = vcmp.eq.f32.partialorder %v1474, 8.507059e+37
    %v1476 = vand.u32 %v1359, 2147483648
    %v1477 = vor.u32 1.1754944e-38, %v1476
    %v1478 = vsel %vm1475, %v1477, %v1473
    %v1479 = vmul.f32 1.0, %v1478
    %v1488 = vrot.slane %v1320, 4
    %v1489 = vrot.slane %v1321, 3
    %v1490 = vsel %vm390, %v1489, %v1488
    %v1491 = vrot.slane %v1322, 2
    %v1492 = vsel %vm393, %v1491, %v1490
    %v1493 = vrot.slane %v1323, 1
    %v1494 = vsel %vm396, %v1493, %v1492
    %v1495 = vsel %vm399, %v1324, %v1494
    %v1496 = vrot.slane %v1325, 7
    %v1497 = vsel %vm402, %v1496, %v1495
    %v1498 = vrot.slane %v1326, 6
    %v1499 = vsel %vm405, %v1498, %v1497
    %v1500 = vrot.slane %v1327, 5
    %v1501 = vsel %vm408, %v1500, %v1499
    %v1511 = vrot.slane %v1374, 4
    %v1512 = vrot.slane %v1389, 3
    %v1513 = vsel %vm390, %v1512, %v1511
    %v1514 = vrot.slane %v1404, 2
    %v1515 = vsel %vm393, %v1514, %v1513
    %v1516 = vrot.slane %v1419, 1
    %v1517 = vsel %vm396, %v1516, %v1515
    %v1518 = vsel %vm399, %v1434, %v1517
    %v1519 = vrot.slane %v1449, 7
    %v1520 = vsel %vm402, %v1519, %v1518
    %v1521 = vrot.slane %v1464, 6
    %v1522 = vsel %vm405, %v1521, %v1520
    %v1523 = vrot.slane %v1479, 5
    %v1524 = vsel %vm408, %v1523, %v1522
    %v1526 = vsel %vm172, %v1501, %v1524
    %v1527 = vmul.f32 %v1526, %v1264
    %1529 = vrot.lane.b32.xlu0 %v1526, 64
    %v1530 = vpop.permute.xlu0 %1529
    %v1532 = vmul.f32 %v1526, %v1530
    %1534 = vrot.lane.b32.xlu0 %v1532, 32
    %v1535 = vpop.permute.xlu0 %1534
    %v1537 = vadd.f32 %v1527, %v1535
    %v1538 = vtanh.pop %v1537
    %1540 = vrot.lane.b32.xlu0 %v1538, 64
    %v1541 = vpop.permute.xlu0 %1540
    %v1543 = vmul.f32 %v1526, %v1541
    %1545 = vrot.lane.b32.xlu0 %v1543, 32
    %v1546 = vpop.permute.xlu0 %1545
    %v1547 = vsel %vm173, %v1546, 0
    %1549 = vmatpush.msra.mxu0 0.0
    %1550 = vmatpush.msra.mxu0 0.0
    %1551 = vmatpush.msra.mxu0 0.0
    %1552 = vmatpush.msra.mxu0 0.0
    %1553 = vmatpush.msra.mxu0 0.0
    %1554 = vmatpush.msra.mxu0 0.0
    %1555 = vmatpush.msra.mxu0 0.0
    %1556 = vmatpush.msra.mxu0 0.0
    %1557 = vmatpush.msra.mxu0 0.0
    %1558 = vmatpush.msra.mxu0 0.0
    %1559 = vmatpush.msra.mxu0 0.0
    %1560 = vmatpush.msra.mxu0 0.0
    %1561 = vmatpush.msra.mxu0 %v167
    %1562 = vmatpush.msra.mxu0 %v166
    %1563 = vmatpush.msra.mxu0 %v165
    %1564 = vmatpush.msra.mxu0 %v164
    %1565 = vmatmul.f32.gmra.mxu0 %v1547
    %v1566 = vpop.f32.mrf.mxu0
    %v1567 = vadd.f32 0.0, %v1566
    %1568 = vdwg.mxu0
    %v1570 = vrot.slane %v1567, 3
    %v1571 = vrot.slane %v1567, 4
    %v1572 = vrot.slane %v1567, 5
    %v1573 = vrot.slane %v1567, 6
    %v1574 = vrot.slane %v1567, 7
    %v1575 = vrot.slane %v1567, 1
    %v1576 = vrot.slane %v1567, 2
    %v1585 = vadd.f32 %v141, %v1570
    %v1586 = vadd.f32 %v144, %v1571
    %v1587 = vadd.f32 %v147, %v1572
    %v1588 = vadd.f32 %v150, %v1573
    %v1589 = vadd.f32 %v153, %v1574
    %v1590 = vadd.f32 %v156, %v1567
    %v1591 = vadd.f32 %v159, %v1575
    %v1592 = vadd.f32 %v162, %v1576
    %v1593 = vtanh.pop %v1585
    %v1594 = vtanh.pop %v1586
    %v1595 = vtanh.pop %v1587
    %v1596 = vtanh.pop %v1588
    %v1597 = vtanh.pop %v1589
    %v1598 = vtanh.pop %v1590
    %v1599 = vtanh.pop %v1591
    %v1600 = vtanh.pop %v1592
    %v1601 = vxor.u32 %v1585, 2147483648
    %v1602 = vxor.u32 %v1586, 2147483648
    %v1603 = vxor.u32 %v1587, 2147483648
    %v1604 = vxor.u32 %v1588, 2147483648
    %v1605 = vxor.u32 %v1589, 2147483648
    %v1606 = vxor.u32 %v1590, 2147483648
    %v1607 = vxor.u32 %v1591, 2147483648
    %v1608 = vxor.u32 %v1592, 2147483648
    %v1609 = vmul.f32 %v1601, 1.442695
    %v1610 = vpow.pop %v1609
    %v1611 = vmul.f32 %v1602, 1.442695
    %v1612 = vpow.pop %v1611
    %v1613 = vmul.f32 %v1603, 1.442695
    %v1614 = vpow.pop %v1613
    %v1615 = vmul.f32 %v1604, 1.442695
    %v1616 = vpow.pop %v1615
    %v1617 = vmul.f32 %v1605, 1.442695
    %v1618 = vpow.pop %v1617
    %v1619 = vmul.f32 %v1606, 1.442695
    %v1620 = vpow.pop %v1619
    %v1621 = vmul.f32 %v1607, 1.442695
    %v1622 = vpow.pop %v1621
    %v1623 = vmul.f32 %v1608, 1.442695
    %v1624 = vpow.pop %v1623
    %v1625 = vadd.f32 %v1610, 1.0
    %v1626 = vadd.f32 %v1612, 1.0
    %v1627 = vadd.f32 %v1614, 1.0
    %v1628 = vadd.f32 %v1616, 1.0
    %v1629 = vadd.f32 %v1618, 1.0
    %v1630 = vadd.f32 %v1620, 1.0
    %v1631 = vadd.f32 %v1622, 1.0
    %v1632 = vadd.f32 %v1624, 1.0
    %v1633 = vrcp.pop %v1625
    %v1634 = vmul.f32 %v1625, %v1633
    %v1635 = vsub.f32 1.0, %v1634
    %v1636 = vmul.f32 %v1633, %v1635
    %v1637 = vadd.f32 %v1633, %v1636
    %vm1638 = vweird.f32 %v1625
    %vm1639 = vweird.f32 %v1633
    %vm1640 = vmor %vm1638, %vm1639
    %v1641 = vsel %vm1640, %v1633, %v1637
    %v1642 = vand.u32 2147483647, %v1625
    %vm1643 = vcmp.eq.f32.partialorder %v1642, 8.507059e+37
    %v1644 = vand.u32 %v1625, 2147483648
    %v1645 = vor.u32 1.1754944e-38, %v1644
    %v1646 = vsel %vm1643, %v1645, %v1641
    %v1647 = vmul.f32 1.0, %v1646
    %v1648 = vrcp.pop %v1626
    %v1649 = vmul.f32 %v1626, %v1648
    %v1650 = vsub.f32 1.0, %v1649
    %v1651 = vmul.f32 %v1648, %v1650
    %v1652 = vadd.f32 %v1648, %v1651
    %vm1653 = vweird.f32 %v1626
    %vm1654 = vweird.f32 %v1648
    %vm1655 = vmor %vm1653, %vm1654
    %v1656 = vsel %vm1655, %v1648, %v1652
    %v1657 = vand.u32 2147483647, %v1626
    %vm1658 = vcmp.eq.f32.partialorder %v1657, 8.507059e+37
    %v1659 = vand.u32 %v1626, 2147483648
    %v1660 = vor.u32 1.1754944e-38, %v1659
    %v1661 = vsel %vm1658, %v1660, %v1656
    %v1662 = vmul.f32 1.0, %v1661
    %v1663 = vrcp.pop %v1627
    %v1664 = vmul.f32 %v1627, %v1663
    %v1665 = vsub.f32 1.0, %v1664
    %v1666 = vmul.f32 %v1663, %v1665
    %v1667 = vadd.f32 %v1663, %v1666
    %vm1668 = vweird.f32 %v1627
    %vm1669 = vweird.f32 %v1663
    %vm1670 = vmor %vm1668, %vm1669
    %v1671 = vsel %vm1670, %v1663, %v1667
    %v1672 = vand.u32 2147483647, %v1627
    %vm1673 = vcmp.eq.f32.partialorder %v1672, 8.507059e+37
    %v1674 = vand.u32 %v1627, 2147483648
    %v1675 = vor.u32 1.1754944e-38, %v1674
    %v1676 = vsel %vm1673, %v1675, %v1671
    %v1677 = vmul.f32 1.0, %v1676
    %v1678 = vrcp.pop %v1628
    %v1679 = vmul.f32 %v1628, %v1678
    %v1680 = vsub.f32 1.0, %v1679
    %v1681 = vmul.f32 %v1678, %v1680
    %v1682 = vadd.f32 %v1678, %v1681
    %vm1683 = vweird.f32 %v1628
    %vm1684 = vweird.f32 %v1678
    %vm1685 = vmor %vm1683, %vm1684
    %v1686 = vsel %vm1685, %v1678, %v1682
    %v1687 = vand.u32 2147483647, %v1628
    %vm1688 = vcmp.eq.f32.partialorder %v1687, 8.507059e+37
    %v1689 = vand.u32 %v1628, 2147483648
    %v1690 = vor.u32 1.1754944e-38, %v1689
    %v1691 = vsel %vm1688, %v1690, %v1686
    %v1692 = vmul.f32 1.0, %v1691
    %v1693 = vrcp.pop %v1629
    %v1694 = vmul.f32 %v1629, %v1693
    %v1695 = vsub.f32 1.0, %v1694
    %v1696 = vmul.f32 %v1693, %v1695
    %v1697 = vadd.f32 %v1693, %v1696
    %vm1698 = vweird.f32 %v1629
    %vm1699 = vweird.f32 %v1693
    %vm1700 = vmor %vm1698, %vm1699
    %v1701 = vsel %vm1700, %v1693, %v1697
    %v1702 = vand.u32 2147483647, %v1629
    %vm1703 = vcmp.eq.f32.partialorder %v1702, 8.507059e+37
    %v1704 = vand.u32 %v1629, 2147483648
    %v1705 = vor.u32 1.1754944e-38, %v1704
    %v1706 = vsel %vm1703, %v1705, %v1701
    %v1707 = vmul.f32 1.0, %v1706
    %v1708 = vrcp.pop %v1630
    %v1709 = vmul.f32 %v1630, %v1708
    %v1710 = vsub.f32 1.0, %v1709
    %v1711 = vmul.f32 %v1708, %v1710
    %v1712 = vadd.f32 %v1708, %v1711
    %vm1713 = vweird.f32 %v1630
    %vm1714 = vweird.f32 %v1708
    %vm1715 = vmor %vm1713, %vm1714
    %v1716 = vsel %vm1715, %v1708, %v1712
    %v1717 = vand.u32 2147483647, %v1630
    %vm1718 = vcmp.eq.f32.partialorder %v1717, 8.507059e+37
    %v1719 = vand.u32 %v1630, 2147483648
    %v1720 = vor.u32 1.1754944e-38, %v1719
    %v1721 = vsel %vm1718, %v1720, %v1716
    %v1722 = vmul.f32 1.0, %v1721
    %v1723 = vrcp.pop %v1631
    %v1724 = vmul.f32 %v1631, %v1723
    %v1725 = vsub.f32 1.0, %v1724
    %v1726 = vmul.f32 %v1723, %v1725
    %v1727 = vadd.f32 %v1723, %v1726
    %vm1728 = vweird.f32 %v1631
    %vm1729 = vweird.f32 %v1723
    %vm1730 = vmor %vm1728, %vm1729
    %v1731 = vsel %vm1730, %v1723, %v1727
    %v1732 = vand.u32 2147483647, %v1631
    %vm1733 = vcmp.eq.f32.partialorder %v1732, 8.507059e+37
    %v1734 = vand.u32 %v1631, 2147483648
    %v1735 = vor.u32 1.1754944e-38, %v1734
    %v1736 = vsel %vm1733, %v1735, %v1731
    %v1737 = vmul.f32 1.0, %v1736
    %v1738 = vrcp.pop %v1632
    %v1739 = vmul.f32 %v1632, %v1738
    %v1740 = vsub.f32 1.0, %v1739
    %v1741 = vmul.f32 %v1738, %v1740
    %v1742 = vadd.f32 %v1738, %v1741
    %vm1743 = vweird.f32 %v1632
    %vm1744 = vweird.f32 %v1738
    %vm1745 = vmor %vm1743, %vm1744
    %v1746 = vsel %vm1745, %v1738, %v1742
    %v1747 = vand.u32 2147483647, %v1632
    %vm1748 = vcmp.eq.f32.partialorder %v1747, 8.507059e+37
    %v1749 = vand.u32 %v1632, 2147483648
    %v1750 = vor.u32 1.1754944e-38, %v1749
    %v1751 = vsel %vm1748, %v1750, %v1746
    %v1752 = vmul.f32 1.0, %v1751
    %v1761 = vrot.slane %v1593, 5
    %v1762 = vrot.slane %v1594, 4
    %v1763 = vsel %vm390, %v1762, %v1761
    %v1764 = vrot.slane %v1595, 3
    %v1765 = vsel %vm393, %v1764, %v1763
    %v1766 = vrot.slane %v1596, 2
    %v1767 = vsel %vm396, %v1766, %v1765
    %v1768 = vrot.slane %v1597, 1
    %v1769 = vsel %vm399, %v1768, %v1767
    %v1770 = vsel %vm402, %v1598, %v1769
    %v1771 = vrot.slane %v1599, 7
    %v1772 = vsel %vm405, %v1771, %v1770
    %v1773 = vrot.slane %v1600, 6
    %v1774 = vsel %vm408, %v1773, %v1772
    %v1784 = vrot.slane %v1647, 5
    %v1785 = vrot.slane %v1662, 4
    %v1786 = vsel %vm390, %v1785, %v1784
    %v1787 = vrot.slane %v1677, 3
    %v1788 = vsel %vm393, %v1787, %v1786
    %v1789 = vrot.slane %v1692, 2
    %v1790 = vsel %vm396, %v1789, %v1788
    %v1791 = vrot.slane %v1707, 1
    %v1792 = vsel %vm399, %v1791, %v1790
    %v1793 = vsel %vm402, %v1722, %v1792
    %v1794 = vrot.slane %v1737, 7
    %v1795 = vsel %vm405, %v1794, %v1793
    %v1796 = vrot.slane %v1752, 6
    %v1797 = vsel %vm408, %v1796, %v1795
    %v1799 = vsel %vm172, %v1774, %v1797
    %v1800 = vmul.f32 %v1799, %v1537
    %1802 = vrot.lane.b32.xlu0 %v1799, 64
    %v1803 = vpop.permute.xlu0 %1802
    %v1805 = vmul.f32 %v1799, %v1803
    %1807 = vrot.lane.b32.xlu0 %v1805, 32
    %v1808 = vpop.permute.xlu0 %1807
    %v1810 = vadd.f32 %v1800, %v1808
    %v1811 = vtanh.pop %v1810
    %1813 = vrot.lane.b32.xlu0 %v1811, 64
    %v1814 = vpop.permute.xlu0 %1813
    %v1816 = vmul.f32 %v1799, %v1814
    %1818 = vrot.lane.b32.xlu0 %v1816, 32
    %v1819 = vpop.permute.xlu0 %1818
    %v1820 = vsel %vm173, %v1819, 0
    %1822 = vmatpush.msra.mxu0 0.0
    %1823 = vmatpush.msra.mxu0 0.0
    %1824 = vmatpush.msra.mxu0 0.0
    %1825 = vmatpush.msra.mxu0 0.0
    %1826 = vmatpush.msra.mxu0 0.0
    %1827 = vmatpush.msra.mxu0 0.0
    %1828 = vmatpush.msra.mxu0 0.0
    %1829 = vmatpush.msra.mxu0 0.0
    %1830 = vmatpush.msra.mxu0 0.0
    %1831 = vmatpush.msra.mxu0 0.0
    %1832 = vmatpush.msra.mxu0 0.0
    %1833 = vmatpush.msra.mxu0 0.0
    %1834 = vmatpush.msra.mxu0 %v167
    %1835 = vmatpush.msra.mxu0 %v166
    %1836 = vmatpush.msra.mxu0 %v165
    %1837 = vmatpush.msra.mxu0 %v164
    %1838 = vmatmul.f32.gmra.mxu0 %v1820
    %v1839 = vpop.f32.mrf.mxu0
    %v1840 = vadd.f32 0.0, %v1839
    %1841 = vdwg.mxu0
    %v1843 = vrot.slane %v1840, 2
    %v1844 = vrot.slane %v1840, 3
    %v1845 = vrot.slane %v1840, 4
    %v1846 = vrot.slane %v1840, 5
    %v1847 = vrot.slane %v1840, 6
    %v1848 = vrot.slane %v1840, 7
    %v1849 = vrot.slane %v1840, 1
    %v1858 = vadd.f32 %v141, %v1843
    %v1859 = vadd.f32 %v144, %v1844
    %v1860 = vadd.f32 %v147, %v1845
    %v1861 = vadd.f32 %v150, %v1846
    %v1862 = vadd.f32 %v153, %v1847
    %v1863 = vadd.f32 %v156, %v1848
    %v1864 = vadd.f32 %v159, %v1840
    %v1865 = vadd.f32 %v162, %v1849
    %v1866 = vtanh.pop %v1858
    %v1867 = vtanh.pop %v1859
    %v1868 = vtanh.pop %v1860
    %v1869 = vtanh.pop %v1861
    %v1870 = vtanh.pop %v1862
    %v1871 = vtanh.pop %v1863
    %v1872 = vtanh.pop %v1864
    %v1873 = vtanh.pop %v1865
    %v1874 = vxor.u32 %v1858, 2147483648
    %v1875 = vxor.u32 %v1859, 2147483648
    %v1876 = vxor.u32 %v1860, 2147483648
    %v1877 = vxor.u32 %v1861, 2147483648
    %v1878 = vxor.u32 %v1862, 2147483648
    %v1879 = vxor.u32 %v1863, 2147483648
    %v1880 = vxor.u32 %v1864, 2147483648
    %v1881 = vxor.u32 %v1865, 2147483648
    %v1882 = vmul.f32 %v1874, 1.442695
    %v1883 = vpow.pop %v1882
    %v1884 = vmul.f32 %v1875, 1.442695
    %v1885 = vpow.pop %v1884
    %v1886 = vmul.f32 %v1876, 1.442695
    %v1887 = vpow.pop %v1886
    %v1888 = vmul.f32 %v1877, 1.442695
    %v1889 = vpow.pop %v1888
    %v1890 = vmul.f32 %v1878, 1.442695
    %v1891 = vpow.pop %v1890
    %v1892 = vmul.f32 %v1879, 1.442695
    %v1893 = vpow.pop %v1892
    %v1894 = vmul.f32 %v1880, 1.442695
    %v1895 = vpow.pop %v1894
    %v1896 = vmul.f32 %v1881, 1.442695
    %v1897 = vpow.pop %v1896
    %v1898 = vadd.f32 %v1883, 1.0
    %v1899 = vadd.f32 %v1885, 1.0
    %v1900 = vadd.f32 %v1887, 1.0
    %v1901 = vadd.f32 %v1889, 1.0
    %v1902 = vadd.f32 %v1891, 1.0
    %v1903 = vadd.f32 %v1893, 1.0
    %v1904 = vadd.f32 %v1895, 1.0
    %v1905 = vadd.f32 %v1897, 1.0
    %v1906 = vrcp.pop %v1898
    %v1907 = vmul.f32 %v1898, %v1906
    %v1908 = vsub.f32 1.0, %v1907
    %v1909 = vmul.f32 %v1906, %v1908
    %v1910 = vadd.f32 %v1906, %v1909
    %vm1911 = vweird.f32 %v1898
    %vm1912 = vweird.f32 %v1906
    %vm1913 = vmor %vm1911, %vm1912
    %v1914 = vsel %vm1913, %v1906, %v1910
    %v1915 = vand.u32 2147483647, %v1898
    %vm1916 = vcmp.eq.f32.partialorder %v1915, 8.507059e+37
    %v1917 = vand.u32 %v1898, 2147483648
    %v1918 = vor.u32 1.1754944e-38, %v1917
    %v1919 = vsel %vm1916, %v1918, %v1914
    %v1920 = vmul.f32 1.0, %v1919
    %v1921 = vrcp.pop %v1899
    %v1922 = vmul.f32 %v1899, %v1921
    %v1923 = vsub.f32 1.0, %v1922
    %v1924 = vmul.f32 %v1921, %v1923
    %v1925 = vadd.f32 %v1921, %v1924
    %vm1926 = vweird.f32 %v1899
    %vm1927 = vweird.f32 %v1921
    %vm1928 = vmor %vm1926, %vm1927
    %v1929 = vsel %vm1928, %v1921, %v1925
    %v1930 = vand.u32 2147483647, %v1899
    %vm1931 = vcmp.eq.f32.partialorder %v1930, 8.507059e+37
    %v1932 = vand.u32 %v1899, 2147483648
    %v1933 = vor.u32 1.1754944e-38, %v1932
    %v1934 = vsel %vm1931, %v1933, %v1929
    %v1935 = vmul.f32 1.0, %v1934
    %v1936 = vrcp.pop %v1900
    %v1937 = vmul.f32 %v1900, %v1936
    %v1938 = vsub.f32 1.0, %v1937
    %v1939 = vmul.f32 %v1936, %v1938
    %v1940 = vadd.f32 %v1936, %v1939
    %vm1941 = vweird.f32 %v1900
    %vm1942 = vweird.f32 %v1936
    %vm1943 = vmor %vm1941, %vm1942
    %v1944 = vsel %vm1943, %v1936, %v1940
    %v1945 = vand.u32 2147483647, %v1900
    %vm1946 = vcmp.eq.f32.partialorder %v1945, 8.507059e+37
    %v1947 = vand.u32 %v1900, 2147483648
    %v1948 = vor.u32 1.1754944e-38, %v1947
    %v1949 = vsel %vm1946, %v1948, %v1944
    %v1950 = vmul.f32 1.0, %v1949
    %v1951 = vrcp.pop %v1901
    %v1952 = vmul.f32 %v1901, %v1951
    %v1953 = vsub.f32 1.0, %v1952
    %v1954 = vmul.f32 %v1951, %v1953
    %v1955 = vadd.f32 %v1951, %v1954
    %vm1956 = vweird.f32 %v1901
    %vm1957 = vweird.f32 %v1951
    %vm1958 = vmor %vm1956, %vm1957
    %v1959 = vsel %vm1958, %v1951, %v1955
    %v1960 = vand.u32 2147483647, %v1901
    %vm1961 = vcmp.eq.f32.partialorder %v1960, 8.507059e+37
    %v1962 = vand.u32 %v1901, 2147483648
    %v1963 = vor.u32 1.1754944e-38, %v1962
    %v1964 = vsel %vm1961, %v1963, %v1959
    %v1965 = vmul.f32 1.0, %v1964
    %v1966 = vrcp.pop %v1902
    %v1967 = vmul.f32 %v1902, %v1966
    %v1968 = vsub.f32 1.0, %v1967
    %v1969 = vmul.f32 %v1966, %v1968
    %v1970 = vadd.f32 %v1966, %v1969
    %vm1971 = vweird.f32 %v1902
    %vm1972 = vweird.f32 %v1966
    %vm1973 = vmor %vm1971, %vm1972
    %v1974 = vsel %vm1973, %v1966, %v1970
    %v1975 = vand.u32 2147483647, %v1902
    %vm1976 = vcmp.eq.f32.partialorder %v1975, 8.507059e+37
    %v1977 = vand.u32 %v1902, 2147483648
    %v1978 = vor.u32 1.1754944e-38, %v1977
    %v1979 = vsel %vm1976, %v1978, %v1974
    %v1980 = vmul.f32 1.0, %v1979
    %v1981 = vrcp.pop %v1903
    %v1982 = vmul.f32 %v1903, %v1981
    %v1983 = vsub.f32 1.0, %v1982
    %v1984 = vmul.f32 %v1981, %v1983
    %v1985 = vadd.f32 %v1981, %v1984
    %vm1986 = vweird.f32 %v1903
    %vm1987 = vweird.f32 %v1981
    %vm1988 = vmor %vm1986, %vm1987
    %v1989 = vsel %vm1988, %v1981, %v1985
    %v1990 = vand.u32 2147483647, %v1903
    %vm1991 = vcmp.eq.f32.partialorder %v1990, 8.507059e+37
    %v1992 = vand.u32 %v1903, 2147483648
    %v1993 = vor.u32 1.1754944e-38, %v1992
    %v1994 = vsel %vm1991, %v1993, %v1989
    %v1995 = vmul.f32 1.0, %v1994
    %v1996 = vrcp.pop %v1904
    %v1997 = vmul.f32 %v1904, %v1996
    %v1998 = vsub.f32 1.0, %v1997
    %v1999 = vmul.f32 %v1996, %v1998
    %v2000 = vadd.f32 %v1996, %v1999
    %vm2001 = vweird.f32 %v1904
    %vm2002 = vweird.f32 %v1996
    %vm2003 = vmor %vm2001, %vm2002
    %v2004 = vsel %vm2003, %v1996, %v2000
    %v2005 = vand.u32 2147483647, %v1904
    %vm2006 = vcmp.eq.f32.partialorder %v2005, 8.507059e+37
    %v2007 = vand.u32 %v1904, 2147483648
    %v2008 = vor.u32 1.1754944e-38, %v2007
    %v2009 = vsel %vm2006, %v2008, %v2004
    %v2010 = vmul.f32 1.0, %v2009
    %v2011 = vrcp.pop %v1905
    %v2012 = vmul.f32 %v1905, %v2011
    %v2013 = vsub.f32 1.0, %v2012
    %v2014 = vmul.f32 %v2011, %v2013
    %v2015 = vadd.f32 %v2011, %v2014
    %vm2016 = vweird.f32 %v1905
    %vm2017 = vweird.f32 %v2011
    %vm2018 = vmor %vm2016, %vm2017
    %v2019 = vsel %vm2018, %v2011, %v2015
    %v2020 = vand.u32 2147483647, %v1905
    %vm2021 = vcmp.eq.f32.partialorder %v2020, 8.507059e+37
    %v2022 = vand.u32 %v1905, 2147483648
    %v2023 = vor.u32 1.1754944e-38, %v2022
    %v2024 = vsel %vm2021, %v2023, %v2019
    %v2025 = vmul.f32 1.0, %v2024
    %v2034 = vrot.slane %v1866, 6
    %v2035 = vrot.slane %v1867, 5
    %v2036 = vsel %vm390, %v2035, %v2034
    %v2037 = vrot.slane %v1868, 4
    %v2038 = vsel %vm393, %v2037, %v2036
    %v2039 = vrot.slane %v1869, 3
    %v2040 = vsel %vm396, %v2039, %v2038
    %v2041 = vrot.slane %v1870, 2
    %v2042 = vsel %vm399, %v2041, %v2040
    %v2043 = vrot.slane %v1871, 1
    %v2044 = vsel %vm402, %v2043, %v2042
    %v2045 = vsel %vm405, %v1872, %v2044
    %v2046 = vrot.slane %v1873, 7
    %v2047 = vsel %vm408, %v2046, %v2045
    %v2057 = vrot.slane %v1920, 6
    %v2058 = vrot.slane %v1935, 5
    %v2059 = vsel %vm390, %v2058, %v2057
    %v2060 = vrot.slane %v1950, 4
    %v2061 = vsel %vm393, %v2060, %v2059
    %v2062 = vrot.slane %v1965, 3
    %v2063 = vsel %vm396, %v2062, %v2061
    %v2064 = vrot.slane %v1980, 2
    %v2065 = vsel %vm399, %v2064, %v2063
    %v2066 = vrot.slane %v1995, 1
    %v2067 = vsel %vm402, %v2066, %v2065
    %v2068 = vsel %vm405, %v2010, %v2067
    %v2069 = vrot.slane %v2025, 7
    %v2070 = vsel %vm408, %v2069, %v2068
    %v2072 = vsel %vm172, %v2047, %v2070
    %v2073 = vmul.f32 %v2072, %v1810
    %2075 = vrot.lane.b32.xlu0 %v2072, 64
    %v2076 = vpop.permute.xlu0 %2075
    %v2078 = vmul.f32 %v2072, %v2076
    %2080 = vrot.lane.b32.xlu0 %v2078, 32
    %v2081 = vpop.permute.xlu0 %2080
    %v2083 = vadd.f32 %v2073, %v2081
    %v2084 = vtanh.pop %v2083
    %2086 = vrot.lane.b32.xlu0 %v2084, 64
    %v2087 = vpop.permute.xlu0 %2086
    %v2089 = vmul.f32 %v2072, %v2087
    %2091 = vrot.lane.b32.xlu0 %v2089, 32
    %v2092 = vpop.permute.xlu0 %2091
    %v2093 = vsel %vm173, %v2092, 0
    %2095 = vmatpush.msra.mxu0 0.0
    %2096 = vmatpush.msra.mxu0 0.0
    %2097 = vmatpush.msra.mxu0 0.0
    %2098 = vmatpush.msra.mxu0 0.0
    %2099 = vmatpush.msra.mxu0 0.0
    %2100 = vmatpush.msra.mxu0 0.0
    %2101 = vmatpush.msra.mxu0 0.0
    %2102 = vmatpush.msra.mxu0 0.0
    %2103 = vmatpush.msra.mxu0 0.0
    %2104 = vmatpush.msra.mxu0 0.0
    %2105 = vmatpush.msra.mxu0 0.0
    %2106 = vmatpush.msra.mxu0 0.0
    %2107 = vmatpush.msra.mxu0 %v167
    %2108 = vmatpush.msra.mxu0 %v166
    %2109 = vmatpush.msra.mxu0 %v165
    %2110 = vmatpush.msra.mxu0 %v164
    %2111 = vmatmul.f32.gmra.mxu0 %v2093
    %v2112 = vpop.f32.mrf.mxu0
    %v2113 = vadd.f32 0.0, %v2112
    %2114 = vdwg.mxu0
    %v2116 = vrot.slane %v2113, 1
    %v2117 = vrot.slane %v2113, 2
    %v2118 = vrot.slane %v2113, 3
    %v2119 = vrot.slane %v2113, 4
    %v2120 = vrot.slane %v2113, 5
    %v2121 = vrot.slane %v2113, 6
    %v2122 = vrot.slane %v2113, 7
    %v2131 = vadd.f32 %v141, %v2116
    %v2132 = vadd.f32 %v144, %v2117
    %v2133 = vadd.f32 %v147, %v2118
    %v2134 = vadd.f32 %v150, %v2119
    %v2135 = vadd.f32 %v153, %v2120
    %v2136 = vadd.f32 %v156, %v2121
    %v2137 = vadd.f32 %v159, %v2122
    %v2138 = vadd.f32 %v162, %v2113
    %v2139 = vtanh.pop %v2131
    %v2140 = vtanh.pop %v2132
    %v2141 = vtanh.pop %v2133
    %v2142 = vtanh.pop %v2134
    %v2143 = vtanh.pop %v2135
    %v2144 = vtanh.pop %v2136
    %v2145 = vtanh.pop %v2137
    %v2146 = vtanh.pop %v2138
    %v2147 = vxor.u32 %v2131, 2147483648
    %v2148 = vxor.u32 %v2132, 2147483648
    %v2149 = vxor.u32 %v2133, 2147483648
    %v2150 = vxor.u32 %v2134, 2147483648
    %v2151 = vxor.u32 %v2135, 2147483648
    %v2152 = vxor.u32 %v2136, 2147483648
    %v2153 = vxor.u32 %v2137, 2147483648
    %v2154 = vxor.u32 %v2138, 2147483648
    %v2155 = vmul.f32 %v2147, 1.442695
    %v2156 = vpow.pop %v2155
    %v2157 = vmul.f32 %v2148, 1.442695
    %v2158 = vpow.pop %v2157
    %v2159 = vmul.f32 %v2149, 1.442695
    %v2160 = vpow.pop %v2159
    %v2161 = vmul.f32 %v2150, 1.442695
    %v2162 = vpow.pop %v2161
    %v2163 = vmul.f32 %v2151, 1.442695
    %v2164 = vpow.pop %v2163
    %v2165 = vmul.f32 %v2152, 1.442695
    %v2166 = vpow.pop %v2165
    %v2167 = vmul.f32 %v2153, 1.442695
    %v2168 = vpow.pop %v2167
    %v2169 = vmul.f32 %v2154, 1.442695
    %v2170 = vpow.pop %v2169
    %v2171 = vadd.f32 %v2156, 1.0
    %v2172 = vadd.f32 %v2158, 1.0
    %v2173 = vadd.f32 %v2160, 1.0
    %v2174 = vadd.f32 %v2162, 1.0
    %v2175 = vadd.f32 %v2164, 1.0
    %v2176 = vadd.f32 %v2166, 1.0
    %v2177 = vadd.f32 %v2168, 1.0
    %v2178 = vadd.f32 %v2170, 1.0
    %v2179 = vrcp.pop %v2171
    %v2180 = vmul.f32 %v2171, %v2179
    %v2181 = vsub.f32 1.0, %v2180
    %v2182 = vmul.f32 %v2179, %v2181
    %v2183 = vadd.f32 %v2179, %v2182
    %vm2184 = vweird.f32 %v2171
    %vm2185 = vweird.f32 %v2179
    %vm2186 = vmor %vm2184, %vm2185
    %v2187 = vsel %vm2186, %v2179, %v2183
    %v2188 = vand.u32 2147483647, %v2171
    %vm2189 = vcmp.eq.f32.partialorder %v2188, 8.507059e+37
    %v2190 = vand.u32 %v2171, 2147483648
    %v2191 = vor.u32 1.1754944e-38, %v2190
    %v2192 = vsel %vm2189, %v2191, %v2187
    %v2193 = vmul.f32 1.0, %v2192
    %v2194 = vrcp.pop %v2172
    %v2195 = vmul.f32 %v2172, %v2194
    %v2196 = vsub.f32 1.0, %v2195
    %v2197 = vmul.f32 %v2194, %v2196
    %v2198 = vadd.f32 %v2194, %v2197
    %vm2199 = vweird.f32 %v2172
    %vm2200 = vweird.f32 %v2194
    %vm2201 = vmor %vm2199, %vm2200
    %v2202 = vsel %vm2201, %v2194, %v2198
    %v2203 = vand.u32 2147483647, %v2172
    %vm2204 = vcmp.eq.f32.partialorder %v2203, 8.507059e+37
    %v2205 = vand.u32 %v2172, 2147483648
    %v2206 = vor.u32 1.1754944e-38, %v2205
    %v2207 = vsel %vm2204, %v2206, %v2202
    %v2208 = vmul.f32 1.0, %v2207
    %v2209 = vrcp.pop %v2173
    %v2210 = vmul.f32 %v2173, %v2209
    %v2211 = vsub.f32 1.0, %v2210
    %v2212 = vmul.f32 %v2209, %v2211
    %v2213 = vadd.f32 %v2209, %v2212
    %vm2214 = vweird.f32 %v2173
    %vm2215 = vweird.f32 %v2209
    %vm2216 = vmor %vm2214, %vm2215
    %v2217 = vsel %vm2216, %v2209, %v2213
    %v2218 = vand.u32 2147483647, %v2173
    %vm2219 = vcmp.eq.f32.partialorder %v2218, 8.507059e+37
    %v2220 = vand.u32 %v2173, 2147483648
    %v2221 = vor.u32 1.1754944e-38, %v2220
    %v2222 = vsel %vm2219, %v2221, %v2217
    %v2223 = vmul.f32 1.0, %v2222
    %v2224 = vrcp.pop %v2174
    %v2225 = vmul.f32 %v2174, %v2224
    %v2226 = vsub.f32 1.0, %v2225
    %v2227 = vmul.f32 %v2224, %v2226
    %v2228 = vadd.f32 %v2224, %v2227
    %vm2229 = vweird.f32 %v2174
    %vm2230 = vweird.f32 %v2224
    %vm2231 = vmor %vm2229, %vm2230
    %v2232 = vsel %vm2231, %v2224, %v2228
    %v2233 = vand.u32 2147483647, %v2174
    %vm2234 = vcmp.eq.f32.partialorder %v2233, 8.507059e+37
    %v2235 = vand.u32 %v2174, 2147483648
    %v2236 = vor.u32 1.1754944e-38, %v2235
    %v2237 = vsel %vm2234, %v2236, %v2232
    %v2238 = vmul.f32 1.0, %v2237
    %v2239 = vrcp.pop %v2175
    %v2240 = vmul.f32 %v2175, %v2239
    %v2241 = vsub.f32 1.0, %v2240
    %v2242 = vmul.f32 %v2239, %v2241
    %v2243 = vadd.f32 %v2239, %v2242
    %vm2244 = vweird.f32 %v2175
    %vm2245 = vweird.f32 %v2239
    %vm2246 = vmor %vm2244, %vm2245
    %v2247 = vsel %vm2246, %v2239, %v2243
    %v2248 = vand.u32 2147483647, %v2175
    %vm2249 = vcmp.eq.f32.partialorder %v2248, 8.507059e+37
    %v2250 = vand.u32 %v2175, 2147483648
    %v2251 = vor.u32 1.1754944e-38, %v2250
    %v2252 = vsel %vm2249, %v2251, %v2247
    %v2253 = vmul.f32 1.0, %v2252
    %v2254 = vrcp.pop %v2176
    %v2255 = vmul.f32 %v2176, %v2254
    %v2256 = vsub.f32 1.0, %v2255
    %v2257 = vmul.f32 %v2254, %v2256
    %v2258 = vadd.f32 %v2254, %v2257
    %vm2259 = vweird.f32 %v2176
    %vm2260 = vweird.f32 %v2254
    %vm2261 = vmor %vm2259, %vm2260
    %v2262 = vsel %vm2261, %v2254, %v2258
    %v2263 = vand.u32 2147483647, %v2176
    %vm2264 = vcmp.eq.f32.partialorder %v2263, 8.507059e+37
    %v2265 = vand.u32 %v2176, 2147483648
    %v2266 = vor.u32 1.1754944e-38, %v2265
    %v2267 = vsel %vm2264, %v2266, %v2262
    %v2268 = vmul.f32 1.0, %v2267
    %v2269 = vrcp.pop %v2177
    %v2270 = vmul.f32 %v2177, %v2269
    %v2271 = vsub.f32 1.0, %v2270
    %v2272 = vmul.f32 %v2269, %v2271
    %v2273 = vadd.f32 %v2269, %v2272
    %vm2274 = vweird.f32 %v2177
    %vm2275 = vweird.f32 %v2269
    %vm2276 = vmor %vm2274, %vm2275
    %v2277 = vsel %vm2276, %v2269, %v2273
    %v2278 = vand.u32 2147483647, %v2177
    %vm2279 = vcmp.eq.f32.partialorder %v2278, 8.507059e+37
    %v2280 = vand.u32 %v2177, 2147483648
    %v2281 = vor.u32 1.1754944e-38, %v2280
    %v2282 = vsel %vm2279, %v2281, %v2277
    %v2283 = vmul.f32 1.0, %v2282
    %v2284 = vrcp.pop %v2178
    %v2285 = vmul.f32 %v2178, %v2284
    %v2286 = vsub.f32 1.0, %v2285
    %v2287 = vmul.f32 %v2284, %v2286
    %v2288 = vadd.f32 %v2284, %v2287
    %vm2289 = vweird.f32 %v2178
    %vm2290 = vweird.f32 %v2284
    %vm2291 = vmor %vm2289, %vm2290
    %v2292 = vsel %vm2291, %v2284, %v2288
    %v2293 = vand.u32 2147483647, %v2178
    %vm2294 = vcmp.eq.f32.partialorder %v2293, 8.507059e+37
    %v2295 = vand.u32 %v2178, 2147483648
    %v2296 = vor.u32 1.1754944e-38, %v2295
    %v2297 = vsel %vm2294, %v2296, %v2292
    %v2298 = vmul.f32 1.0, %v2297
    %v2307 = vrot.slane %v2139, 7
    %v2308 = vrot.slane %v2140, 6
    %v2309 = vsel %vm390, %v2308, %v2307
    %v2310 = vrot.slane %v2141, 5
    %v2311 = vsel %vm393, %v2310, %v2309
    %v2312 = vrot.slane %v2142, 4
    %v2313 = vsel %vm396, %v2312, %v2311
    %v2314 = vrot.slane %v2143, 3
    %v2315 = vsel %vm399, %v2314, %v2313
    %v2316 = vrot.slane %v2144, 2
    %v2317 = vsel %vm402, %v2316, %v2315
    %v2318 = vrot.slane %v2145, 1
    %v2319 = vsel %vm405, %v2318, %v2317
    %v2320 = vsel %vm408, %v2146, %v2319
    %v2330 = vrot.slane %v2193, 7
    %v2331 = vrot.slane %v2208, 6
    %v2332 = vsel %vm390, %v2331, %v2330
    %v2333 = vrot.slane %v2223, 5
    %v2334 = vsel %vm393, %v2333, %v2332
    %v2335 = vrot.slane %v2238, 4
    %v2336 = vsel %vm396, %v2335, %v2334
    %v2337 = vrot.slane %v2253, 3
    %v2338 = vsel %vm399, %v2337, %v2336
    %v2339 = vrot.slane %v2268, 2
    %v2340 = vsel %vm402, %v2339, %v2338
    %v2341 = vrot.slane %v2283, 1
    %v2342 = vsel %vm405, %v2341, %v2340
    %v2343 = vsel %vm408, %v2298, %v2342
    %v2345 = vsel %vm172, %v2320, %v2343
    %v2346 = vmul.f32 %v2345, %v2083
    %2348 = vrot.lane.b32.xlu0 %v2345, 64
    %v2349 = vpop.permute.xlu0 %2348
    %v2351 = vmul.f32 %v2345, %v2349
    %2353 = vrot.lane.b32.xlu0 %v2351, 32
    %v2354 = vpop.permute.xlu0 %2353
    %v2356 = vadd.f32 %v2346, %v2354
    %v2357 = vtanh.pop %v2356
    %2359 = vrot.lane.b32.xlu0 %v2357, 64
    %v2360 = vpop.permute.xlu0 %2359
    %v2362 = vmul.f32 %v2345, %v2360
    %v2363 = vld [vmem:[#allocation8] sm:$0xff]
    %v2364 = vld [vmem:[#allocation8 + $0x8] sm:$0xff]
    %v2365 = vld [vmem:[#allocation8 + $0x10] sm:$0xff]
    %v2366 = vld [vmem:[#allocation8 + $0x18] sm:$0xff]
    %2368 = vrot.lane.b32.xlu0 %v2362, 32
    %v2369 = vpop.permute.xlu0 %2368
    %v2370 = vsel %vm173, %v2369, 0
    %2372 = vmatpush.msra.mxu0 0.0
    %2373 = vmatpush.msra.mxu0 0.0
    %2374 = vmatpush.msra.mxu0 0.0
    %2375 = vmatpush.msra.mxu0 0.0
    %2376 = vmatpush.msra.mxu0 0.0
    %2377 = vmatpush.msra.mxu0 0.0
    %2378 = vmatpush.msra.mxu0 0.0
    %2379 = vmatpush.msra.mxu0 0.0
    %2380 = vmatpush.msra.mxu0 0.0
    %2381 = vmatpush.msra.mxu0 0.0
    %2382 = vmatpush.msra.mxu0 0.0
    %2383 = vmatpush.msra.mxu0 0.0
    %2384 = vmatpush.msra.mxu0 %v2366
    %2385 = vmatpush.msra.mxu0 %v2365
    %2386 = vmatpush.msra.mxu0 %v2364
    %2387 = vmatpush.msra.mxu0 %v2363
    %2388 = vmatmul.f32.gmra.mxu0 %v2370
    %v2389 = vpop.f32.mrf.mxu0
    %v2390 = vadd.f32 0.0, %v2389
    %2391 = vdwg.mxu0
    %2392 = vst [vmem:[#allocation10] sm:$0xff] %v2390
    // Predicated region
    $region38: #{tpu_custom_call.1} parent=1 // pred_check
      _
    $region39: #{tpu_custom_call.1} parent=1 // pred_check_branch
      %2394 = sbr.rel (0) target = $region41
    $region40: #{tpu_custom_call.1} parent=1 // pred_region
      %2396 = vsyncadd [#allocation4], 0
      %s2398 = sshll.u32 [#allocation10], 4
      %s2399 = int_to_ptr.vmem [resolvable:$true] %s2398
      %s2400 = sshll.u32 %s5, 4
      %s2401 = int_to_ptr.hbm [resolvable:$true] %s2400
      %2403 = dma.vmem_to_hbm [thread:$0]  %s2399, 128, %s2401, [#allocation4]
    $region41: #{tpu_custom_call.1} parent=1 // pred_fallthru
      _
    // Predicated region
    $region42: #{tpu_custom_call.1} parent=1 // pred_check
      _
    $region43: #{tpu_custom_call.1} parent=1 // pred_check_branch
      %2405 = sbr.rel (0) target = $region45
    $region44: #{tpu_custom_call.1} parent=1 // pred_region
      %2407 = dma.done [#allocation4], 128
    $region45: #{tpu_custom_call.1} parent=1 // pred_fallthru
      _
    %2408 = vsyncpa [#allocation3], 1
    %2409 = vsyncpa [#allocation6], 1
    %2410 = vsyncpa [#allocation9], 1
    %2411 = vsyncpa [#allocation4], 1

</llo_original>
